<compile_context>
chip_gen: v7x
topology: tpu7x:2x2x1
jax: 0.10.0
libtpu: 0.0.40
codegen_flags: <defaults>
</compile_context>

<pallas_src>
import functools

import jax
import jax.numpy as jnp
from jax.experimental import pallas as pl
from jax.experimental.pallas import tpu as pltpu


def _round_up(x, m):
    return ((x + m - 1) // m) * m


def _cvae_kernel(
    # batch-tiled inputs (f32; cast to the MXU operand dtype in-kernel)
    u_ref,       # [TB, N]
    p_ref,       # [TB, num_params]
    eps_ref,     # [TB, latent]
    # encoder params
    we1u_ref, we1p_ref, be1_ref,   # [N, h0], [num_params, h0], [1, h0]
    we2_ref, be2_ref,              # [h0, h1], [1, h1]
    wmusig_ref, bmusig_ref,        # [h1, 2*latent], [1, 2*latent] (fused heads)
    # decoder params
    wd1z_ref, wd1p_ref, bd1_ref,   # [latent, h1], [num_params, h1], [1, h1]
    wd2_ref, bd2_ref,              # [h1, h0], [1, h0]
    wd3_ref, bd3_ref,              # [h0, N], [1, N]
    # single lane-dense output slab: u_prime || mu || sigma
    out_ref,     # [TB, N + 2*latent]  (f32)
    *, latent,
):
    cdt = we1u_ref.dtype  # MXU operand dtype (e.g. bfloat16); accumulate in f32

    u = u_ref[...].astype(cdt)
    p = p_ref[...].astype(cdt)
    eps = eps_ref[...]

    # ---------------- Encoder ----------------
    # a1 = cat(u, params) @ We1 + b1  ==  u @ We1_u + params @ We1_p + b1
    a1 = (
        jnp.dot(u, we1u_ref[...], preferred_element_type=jnp.float32)
        + jnp.dot(p, we1p_ref[...], preferred_element_type=jnp.float32)
        + be1_ref[...]
    )
    z1 = jnp.maximum(a1, 0.0)

    a2 = (
        jnp.dot(z1.astype(cdt), we2_ref[...], preferred_element_type=jnp.float32)
        + be2_ref[...]
    )
    z2 = jnp.maximum(a2, 0.0)

    # Fused mu / sigma heads: one matmul, static column split.
    musig = (
        jnp.dot(z2.astype(cdt), wmusig_ref[...], preferred_element_type=jnp.float32)
        + bmusig_ref[...]
    )
    mu = musig[:, :latent]
    sigma = musig[:, latent:]

    # Reparameterization (f32 VPU/EUP): z = mu + exp(sigma / 2) * eps
    z = mu + jnp.exp(sigma * 0.5) * eps

    # ---------------- Decoder ----------------
    # d1 = cat(z, params) @ Wd1 + b1  ==  z @ Wd1_z + params @ Wd1_p + b1
    d1 = (
        jnp.dot(z.astype(cdt), wd1z_ref[...], preferred_element_type=jnp.float32)
        + jnp.dot(p, wd1p_ref[...], preferred_element_type=jnp.float32)
        + bd1_ref[...]
    )
    h1 = jnp.maximum(d1, 0.0)

    d2 = (
        jnp.dot(h1.astype(cdt), wd2_ref[...], preferred_element_type=jnp.float32)
        + bd2_ref[...]
    )
    h2 = jnp.maximum(d2, 0.0)

    u_prime = (
        jnp.dot(h2.astype(cdt), wd3_ref[...], preferred_element_type=jnp.float32)
        + bd3_ref[...]
    )

    # One output slab: [u_prime || mu || sigma]
    n_out = u_prime.shape[1]
    out_ref[:, :n_out] = u_prime
    out_ref[:, n_out:] = musig


def cvae_forward(u, params, eps, weights, train=True, batch_tile=4096):
    """Fused CVAE forward pass.

    u:      [B, N]            float32
    params: [B, num_params]   float32
    eps:    [B, latent]       float32 (pre-sampled standard normal)
    weights: dict from init_cvae_params (weights bf16, biases f32)
    """
    B, N = u.shape
    num_params = params.shape[1]
    latent = eps.shape[1]
    h0, h1 = weights["we2"].shape
    out_w = N + 2 * latent

    weight_args = [
        weights["we1u"], weights["we1p"], weights["be1"],
        weights["we2"], weights["be2"],
        weights["wmusig"], weights["bmusig"],
        weights["wd1z"], weights["wd1p"], weights["bd1"],
        weights["wd2"], weights["bd2"],
        weights["wd3"], weights["bd3"],
    ]
    weight_bytes = sum(int(w.size) * w.dtype.itemsize for w in weight_args)

    # -------- batch tile selection --------
    # Per-row HBM traffic: f32 inputs (u, params, eps) + f32 output slab.
    row_bytes = 4 * (N + num_params + latent + out_w)
    B8 = _round_up(B, 8)

    # VMEM budget for double-buffered batch tiles; target ~48 MiB working set
    # (fits v7x's 64 MiB per-TensorCore VMEM) minus (conservatively
    # double-buffered) resident weights.
    io_budget = max(8 << 20, (48 << 20) - 2 * weight_bytes)
    tb_cap = max(8, (io_budget // (2 * row_bytes)) // 8 * 8)

    TB = min(batch_tile, B8, tb_cap)
    # v7x megacore: ensure >=2 grid steps on the "parallel" batch axis so both
    # TensorCores get work, but only when that costs no extra batch padding.
    if (B8 + TB - 1) // TB < 2 and B8 % 16 == 0 and (B8 // 2) <= tb_cap:
        TB = B8 // 2

    B_pad = _round_up(B, TB)
    u_in, p_in, eps_in = u, params, eps
    if B_pad != B:
        # Rare ragged-batch fallback; padded rows are computed and sliced off.
        pad = ((0, B_pad - B), (0, 0))
        u_in = jnp.pad(u_in, pad)
        p_in = jnp.pad(p_in, pad)
        eps_in = jnp.pad(eps_in, pad)

    grid = (B_pad // TB,)
    args = [u_in, p_in, eps_in] + weight_args

    # Advisory cost estimate for XLA's scheduler.
    flops = 2 * B_pad * (
        N * h0 + num_params * h0 + h0 * h1 + h1 * 2 * latent
        + latent * h1 + num_params * h1 + h1 * h0 + h0 * N
    )
    cost = pl.CostEstimate(
        flops=int(flops),
        transcendentals=int(B_pad * latent),
        bytes_accessed=int(B_pad * row_bytes + weight_bytes),
    )

    # Explicit VMEM limit: computed working set, capped at 64 MiB (valid on
    # v7x's smaller per-TC VMEM as well as v5e/v6e).
    vmem_need = 2 * weight_bytes + 2 * TB * row_bytes + (4 << 20)
    vmem_limit = int(min(max(vmem_need, 16 << 20), 64 << 20))

    def _batch_spec(feat):
        return pl.BlockSpec((TB, feat), lambda i: (i, 0))

    def _run(single_buffer_weights):
        if single_buffer_weights:
            def _weight_spec(w):
                # Grid-invariant weights: single-buffer them to halve their
                # VMEM footprint (matters on v7x when widths grow).
                return pl.BlockSpec(w.shape, lambda i: (0, 0),
                                    pipeline_mode=pl.Buffered(1))
        else:
            def _weight_spec(w):
                return pl.BlockSpec(w.shape, lambda i: (0, 0))

        in_specs = (
            [_batch_spec(N), _batch_spec(num_params), _batch_spec(latent)]
            + [_weight_spec(w) for w in weight_args]
        )
        out_specs = _batch_spec(out_w)

        return pl.pallas_call(
            functools.partial(_cvae_kernel, latent=latent),
            out_shape=jax.ShapeDtypeStruct((B_pad, out_w), jnp.float32),
            grid_spec=pltpu.PrefetchScalarGridSpec(
                num_scalar_prefetch=0,
                grid=grid,
                in_specs=in_specs,
                out_specs=out_specs,
            ),
            compiler_params=pltpu.CompilerParams(
                dimension_semantics=("parallel",),
                vmem_limit_bytes=vmem_limit,
            ),
            cost_estimate=cost,
        )(*args)

    try:
        out_pad = _run(True)
    except Exception:
        # pipeline_mode=pl.Buffered(1) not accepted on this jax version /
        # backend; fall back to default double-buffered weights (costs only
        # VMEM headroom, identical results).
        out_pad = _run(False)

    out = out_pad[:B]
    u_prime = out[:, :N]
    mu = out[:, N:N + latent]
    sigma = out[:, N + latent:]

    if train:
        return u_prime, mu, sigma
    return u_prime


def init_cvae_params(key, N, num_params, latent, hidden_dims,
                     compute_dtype=jnp.bfloat16):
    """PyTorch-Linear-like init.  Weights [in, out] in compute_dtype, biases f32."""
    h0, h1 = hidden_dims

    def linear(key, fan_in, fan_out):
        kw, kb = jax.random.split(key)
        bound = 1.0 / jnp.sqrt(jnp.float32(fan_in))
        w = jax.random.uniform(kw, (fan_in, fan_out), jnp.float32, -bound, bound)
        b = jax.random.uniform(kb, (1, fan_out), jnp.float32, -bound, bound)
        return w, b

    keys = jax.random.split(key, 7)

    # Encoder l1: row-split so the kernel computes u @ We1_u + params @ We1_p.
    we1, be1 = linear(keys[0], N + num_params, h0)
    we1u, we1p = we1[:N, :], we1[N:, :]
    we2, be2 = linear(keys[1], h0, h1)
    wmu, bmu = linear(keys[2], h1, latent)
    wsig, bsig = linear(keys[3], h1, latent)
    # Fuse mu/sigma heads column-wise.
    wmusig = jnp.concatenate([wmu, wsig], axis=1)
    bmusig = jnp.concatenate([bmu, bsig], axis=1)

    # Decoder l1: split rows into z-part and params-part (z produced in-kernel).
    wd1, bd1 = linear(keys[4], latent + num_params, h1)
    wd1z, wd1p = wd1[:latent, :], wd1[latent:, :]
    wd2, bd2 = linear(keys[5], h1, h0)
    wd3, bd3 = linear(keys[6], h0, N)

    c = lambda w: w.astype(compute_dtype)
    return dict(
        we1u=c(we1u), we1p=c(we1p), be1=be1,
        we2=c(we2), be2=be2,
        wmusig=c(wmusig), bmusig=bmusig,
        wd1z=c(wd1z), wd1p=c(wd1p), bd1=bd1,
        wd2=c(wd2), bd2=bd2,
        wd3=c(wd3), bd3=bd3,
    )


def cvae_reference(u, p, eps, w):
    """Pure-JAX reference with the same dtype policy as the kernel."""
    cdt = w["we1u"].dtype
    latent = w["wd1z"].shape[0]

    uc = u.astype(cdt)
    pc = p.astype(cdt)
    a1 = (
        jnp.dot(uc, w["we1u"], preferred_element_type=jnp.float32)
        + jnp.dot(pc, w["we1p"], preferred_element_type=jnp.float32)
        + w["be1"]
    )
    z1 = jnp.maximum(a1, 0.0)
    a2 = jnp.dot(z1.astype(cdt), w["we2"], preferred_element_type=jnp.float32) + w["be2"]
    z2 = jnp.maximum(a2, 0.0)
    musig = (
        jnp.dot(z2.astype(cdt), w["wmusig"], preferred_element_type=jnp.float32)
        + w["bmusig"]
    )
    mu, sigma = musig[:, :latent], musig[:, latent:]
    z = mu + jnp.exp(sigma / 2.0) * eps
    d1 = (
        jnp.dot(z.astype(cdt), w["wd1z"], preferred_element_type=jnp.float32)
        + jnp.dot(pc, w["wd1p"], preferred_element_type=jnp.float32)
        + w["bd1"]
    )
    h1 = jnp.maximum(d1, 0.0)
    d2 = jnp.dot(h1.astype(cdt), w["wd2"], preferred_element_type=jnp.float32) + w["bd2"]
    h2 = jnp.maximum(d2, 0.0)
    u_prime = jnp.dot(h2.astype(cdt), w["wd3"], preferred_element_type=jnp.float32) + w["bd3"]
    return u_prime, mu, sigma


if __name__ == "__main__":
    # Small, module-consistent shapes.
    B = 8            # batch
    N = 16           # signal dimension
    num_params = 4   # conditioning params
    latent = 8       # latent dimension
    hidden_dims = (32, 24)

    key = jax.random.PRNGKey(0)
    k_u, k_p, k_eps, k_w = jax.random.split(key, 4)

    u = jax.random.normal(k_u, (B, N), dtype=jnp.float32)
    params = jax.random.normal(k_p, (B, num_params), dtype=jnp.float32)
    # torch.randn_like(sigma) equivalent, sampled outside the kernel.
    eps = jax.random.normal(k_eps, (B, latent), dtype=jnp.float32)

    weights = init_cvae_params(k_w, N, num_params, latent, hidden_dims)

    u_prime, mu, sigma = cvae_forward(u, params, eps, weights, train=True)
    jax.block_until_ready((u_prime, mu, sigma))

    # Correctness check against pure-JAX reference (same bf16-operand policy).
    ref_up, ref_mu, ref_sig = cvae_reference(u, params, eps, weights)
    assert jnp.allclose(u_prime, ref_up, atol=1e-3, rtol=1e-3)
    assert jnp.allclose(mu, ref_mu, atol=1e-3, rtol=1e-3)
    assert jnp.allclose(sigma, ref_sig, atol=1e-3, rtol=1e-3)

    print("KERNEL_OK")
</pallas_src>

<mosaic_0001>
module attributes {stable_mosaic.version = 11 : i64} {
  func.func @_cvae_kernel(%arg0: i32, %arg1: memref<8x16xf32, #tpu.memory_space<vmem>>, %arg2: memref<8x4xf32, #tpu.memory_space<vmem>>, %arg3: memref<8x8xf32, #tpu.memory_space<vmem>>, %arg4: memref<16x32xbf16, #tpu.memory_space<vmem>>, %arg5: memref<4x32xbf16, #tpu.memory_space<vmem>>, %arg6: memref<1x32xf32, #tpu.memory_space<vmem>>, %arg7: memref<32x24xbf16, #tpu.memory_space<vmem>>, %arg8: memref<1x24xf32, #tpu.memory_space<vmem>>, %arg9: memref<24x16xbf16, #tpu.memory_space<vmem>>, %arg10: memref<1x16xf32, #tpu.memory_space<vmem>>, %arg11: memref<8x24xbf16, #tpu.memory_space<vmem>>, %arg12: memref<4x24xbf16, #tpu.memory_space<vmem>>, %arg13: memref<1x24xf32, #tpu.memory_space<vmem>>, %arg14: memref<24x32xbf16, #tpu.memory_space<vmem>>, %arg15: memref<1x32xf32, #tpu.memory_space<vmem>>, %arg16: memref<32x16xbf16, #tpu.memory_space<vmem>>, %arg17: memref<1x16xf32, #tpu.memory_space<vmem>>, %arg18: memref<8x32xf32, #tpu.memory_space<vmem>>) attributes {dimension_semantics = [#tpu.dimension_semantics<parallel>], iteration_bounds = array<i64: 1>, scalar_prefetch = 0 : i64, scratch_operands = 0 : i64, tpu.core_type = #tpu.core_type<tc>, window_params = [{transform_indices = @transform_0, window_bounds = array<i64: 8, 16>}, {transform_indices = @transform_1, window_bounds = array<i64: 8, 4>}, {transform_indices = @transform_2, window_bounds = array<i64: 8, 8>}, {pipeline_mode = #tpu.pipeline_mode<synchronous>, transform_indices = @transform_3, window_bounds = array<i64: 16, 32>}, {pipeline_mode = #tpu.pipeline_mode<synchronous>, transform_indices = @transform_4, window_bounds = array<i64: 4, 32>}, {pipeline_mode = #tpu.pipeline_mode<synchronous>, transform_indices = @transform_5, window_bounds = array<i64: 1, 32>}, {pipeline_mode = #tpu.pipeline_mode<synchronous>, transform_indices = @transform_6, window_bounds = array<i64: 32, 24>}, {pipeline_mode = #tpu.pipeline_mode<synchronous>, transform_indices = @transform_7, window_bounds = array<i64: 1, 24>}, {pipeline_mode = #tpu.pipeline_mode<synchronous>, transform_indices = @transform_8, window_bounds = array<i64: 24, 16>}, {pipeline_mode = #tpu.pipeline_mode<synchronous>, transform_indices = @transform_9, window_bounds = array<i64: 1, 16>}, {pipeline_mode = #tpu.pipeline_mode<synchronous>, transform_indices = @transform_10, window_bounds = array<i64: 8, 24>}, {pipeline_mode = #tpu.pipeline_mode<synchronous>, transform_indices = @transform_11, window_bounds = array<i64: 4, 24>}, {pipeline_mode = #tpu.pipeline_mode<synchronous>, transform_indices = @transform_12, window_bounds = array<i64: 1, 24>}, {pipeline_mode = #tpu.pipeline_mode<synchronous>, transform_indices = @transform_13, window_bounds = array<i64: 24, 32>}, {pipeline_mode = #tpu.pipeline_mode<synchronous>, transform_indices = @transform_14, window_bounds = array<i64: 1, 32>}, {pipeline_mode = #tpu.pipeline_mode<synchronous>, transform_indices = @transform_15, window_bounds = array<i64: 32, 16>}, {pipeline_mode = #tpu.pipeline_mode<synchronous>, transform_indices = @transform_16, window_bounds = array<i64: 1, 16>}, {transform_indices = @transform_17, window_bounds = array<i64: 8, 32>}]} {
    %c0 = arith.constant 0 : index
    %c0_0 = arith.constant 0 : index
    %0 = vector.load %arg1[%c0, %c0_0] : memref<8x16xf32, #tpu.memory_space<vmem>>, vector<8x16xf32>
    %1 = arith.truncf %0 : vector<8x16xf32> to vector<8x16xbf16>
    %c0_1 = arith.constant 0 : index
    %c0_2 = arith.constant 0 : index
    %2 = vector.load %arg2[%c0_1, %c0_2] : memref<8x4xf32, #tpu.memory_space<vmem>>, vector<8x4xf32>
    %3 = arith.truncf %2 : vector<8x4xf32> to vector<8x4xbf16>
    %c0_3 = arith.constant 0 : index
    %c0_4 = arith.constant 0 : index
    %4 = vector.load %arg3[%c0_3, %c0_4] : memref<8x8xf32, #tpu.memory_space<vmem>>, vector<8x8xf32>
    %c0_5 = arith.constant 0 : index
    %c0_6 = arith.constant 0 : index
    %5 = vector.load %arg4[%c0_5, %c0_6] : memref<16x32xbf16, #tpu.memory_space<vmem>>, vector<16x32xbf16>
    %cst = arith.constant dense<0.000000e+00> : vector<8x32xf32>
    %6 = tpu.matmul %1, %5, %cst {dimension_numbers = #tpu.dot_dimension_numbers<[1], [0], [0], [1], [0, 0, 1, 1], [], []>} : vector<8x16xbf16>, vector<16x32xbf16>, vector<8x32xf32> -> vector<8x32xf32>
    %c0_7 = arith.constant 0 : index
    %c0_8 = arith.constant 0 : index
    %7 = vector.load %arg5[%c0_7, %c0_8] : memref<4x32xbf16, #tpu.memory_space<vmem>>, vector<4x32xbf16>
    %cst_9 = arith.constant dense<0.000000e+00> : vector<8x32xf32>
    %8 = tpu.matmul %3, %7, %cst_9 {dimension_numbers = #tpu.dot_dimension_numbers<[1], [0], [0], [1], [0, 0, 1, 1], [], []>} : vector<8x4xbf16>, vector<4x32xbf16>, vector<8x32xf32> -> vector<8x32xf32>
    %9 = arith.addf %6, %8 : vector<8x32xf32>
    %c0_10 = arith.constant 0 : index
    %c0_11 = arith.constant 0 : index
    %10 = vector.load %arg6[%c0_10, %c0_11] : memref<1x32xf32, #tpu.memory_space<vmem>>, vector<1x32xf32>
    %11 = vector.broadcast %10 : vector<1x32xf32> to vector<8x32xf32>
    %12 = arith.addf %9, %11 : vector<8x32xf32>
    %cst_12 = arith.constant 0.000000e+00 : f32
    %13 = vector.broadcast %cst_12 : f32 to vector<8x32xf32>
    %14 = arith.maximumf %12, %13 : vector<8x32xf32>
    %15 = arith.truncf %14 : vector<8x32xf32> to vector<8x32xbf16>
    %c0_13 = arith.constant 0 : index
    %c0_14 = arith.constant 0 : index
    %16 = vector.load %arg7[%c0_13, %c0_14] : memref<32x24xbf16, #tpu.memory_space<vmem>>, vector<32x24xbf16>
    %cst_15 = arith.constant dense<0.000000e+00> : vector<8x24xf32>
    %17 = tpu.matmul %15, %16, %cst_15 {dimension_numbers = #tpu.dot_dimension_numbers<[1], [0], [0], [1], [0, 0, 1, 1], [], []>} : vector<8x32xbf16>, vector<32x24xbf16>, vector<8x24xf32> -> vector<8x24xf32>
    %c0_16 = arith.constant 0 : index
    %c0_17 = arith.constant 0 : index
    %18 = vector.load %arg8[%c0_16, %c0_17] : memref<1x24xf32, #tpu.memory_space<vmem>>, vector<1x24xf32>
    %19 = vector.broadcast %18 : vector<1x24xf32> to vector<8x24xf32>
    %20 = arith.addf %17, %19 : vector<8x24xf32>
    %cst_18 = arith.constant 0.000000e+00 : f32
    %21 = vector.broadcast %cst_18 : f32 to vector<8x24xf32>
    %22 = arith.maximumf %20, %21 : vector<8x24xf32>
    %23 = arith.truncf %22 : vector<8x24xf32> to vector<8x24xbf16>
    %c0_19 = arith.constant 0 : index
    %c0_20 = arith.constant 0 : index
    %24 = vector.load %arg9[%c0_19, %c0_20] : memref<24x16xbf16, #tpu.memory_space<vmem>>, vector<24x16xbf16>
    %cst_21 = arith.constant dense<0.000000e+00> : vector<8x16xf32>
    %25 = tpu.matmul %23, %24, %cst_21 {dimension_numbers = #tpu.dot_dimension_numbers<[1], [0], [0], [1], [0, 0, 1, 1], [], []>} : vector<8x24xbf16>, vector<24x16xbf16>, vector<8x16xf32> -> vector<8x16xf32>
    %c0_22 = arith.constant 0 : index
    %c0_23 = arith.constant 0 : index
    %26 = vector.load %arg10[%c0_22, %c0_23] : memref<1x16xf32, #tpu.memory_space<vmem>>, vector<1x16xf32>
    %27 = vector.broadcast %26 : vector<1x16xf32> to vector<8x16xf32>
    %28 = arith.addf %25, %27 : vector<8x16xf32>
    %29 = vector.extract_strided_slice %28 {offsets = [0, 0], sizes = [8, 8], strides = [1, 1]} : vector<8x16xf32> to vector<8x8xf32>
    %30 = vector.extract_strided_slice %28 {offsets = [0, 8], sizes = [8, 8], strides = [1, 1]} : vector<8x16xf32> to vector<8x8xf32>
    %cst_24 = arith.constant 5.000000e-01 : f32
    %31 = vector.broadcast %cst_24 : f32 to vector<8x8xf32>
    %32 = arith.mulf %30, %31 : vector<8x8xf32>
    %33 = math.exp %32 : vector<8x8xf32>
    %34 = arith.mulf %33, %4 : vector<8x8xf32>
    %35 = arith.addf %29, %34 : vector<8x8xf32>
    %36 = arith.truncf %35 : vector<8x8xf32> to vector<8x8xbf16>
    %c0_25 = arith.constant 0 : index
    %c0_26 = arith.constant 0 : index
    %37 = vector.load %arg11[%c0_25, %c0_26] : memref<8x24xbf16, #tpu.memory_space<vmem>>, vector<8x24xbf16>
    %cst_27 = arith.constant dense<0.000000e+00> : vector<8x24xf32>
    %38 = tpu.matmul %36, %37, %cst_27 {dimension_numbers = #tpu.dot_dimension_numbers<[1], [0], [0], [1], [0, 0, 1, 1], [], []>} : vector<8x8xbf16>, vector<8x24xbf16>, vector<8x24xf32> -> vector<8x24xf32>
    %c0_28 = arith.constant 0 : index
    %c0_29 = arith.constant 0 : index
    %39 = vector.load %arg12[%c0_28, %c0_29] : memref<4x24xbf16, #tpu.memory_space<vmem>>, vector<4x24xbf16>
    %cst_30 = arith.constant dense<0.000000e+00> : vector<8x24xf32>
    %40 = tpu.matmul %3, %39, %cst_30 {dimension_numbers = #tpu.dot_dimension_numbers<[1], [0], [0], [1], [0, 0, 1, 1], [], []>} : vector<8x4xbf16>, vector<4x24xbf16>, vector<8x24xf32> -> vector<8x24xf32>
    %41 = arith.addf %38, %40 : vector<8x24xf32>
    %c0_31 = arith.constant 0 : index
    %c0_32 = arith.constant 0 : index
    %42 = vector.load %arg13[%c0_31, %c0_32] : memref<1x24xf32, #tpu.memory_space<vmem>>, vector<1x24xf32>
    %43 = vector.broadcast %42 : vector<1x24xf32> to vector<8x24xf32>
    %44 = arith.addf %41, %43 : vector<8x24xf32>
    %cst_33 = arith.constant 0.000000e+00 : f32
    %45 = vector.broadcast %cst_33 : f32 to vector<8x24xf32>
    %46 = arith.maximumf %44, %45 : vector<8x24xf32>
    %47 = arith.truncf %46 : vector<8x24xf32> to vector<8x24xbf16>
    %c0_34 = arith.constant 0 : index
    %c0_35 = arith.constant 0 : index
    %48 = vector.load %arg14[%c0_34, %c0_35] : memref<24x32xbf16, #tpu.memory_space<vmem>>, vector<24x32xbf16>
    %cst_36 = arith.constant dense<0.000000e+00> : vector<8x32xf32>
    %49 = tpu.matmul %47, %48, %cst_36 {dimension_numbers = #tpu.dot_dimension_numbers<[1], [0], [0], [1], [0, 0, 1, 1], [], []>} : vector<8x24xbf16>, vector<24x32xbf16>, vector<8x32xf32> -> vector<8x32xf32>
    %c0_37 = arith.constant 0 : index
    %c0_38 = arith.constant 0 : index
    %50 = vector.load %arg15[%c0_37, %c0_38] : memref<1x32xf32, #tpu.memory_space<vmem>>, vector<1x32xf32>
    %51 = vector.broadcast %50 : vector<1x32xf32> to vector<8x32xf32>
    %52 = arith.addf %49, %51 : vector<8x32xf32>
    %cst_39 = arith.constant 0.000000e+00 : f32
    %53 = vector.broadcast %cst_39 : f32 to vector<8x32xf32>
    %54 = arith.maximumf %52, %53 : vector<8x32xf32>
    %55 = arith.truncf %54 : vector<8x32xf32> to vector<8x32xbf16>
    %c0_40 = arith.constant 0 : index
    %c0_41 = arith.constant 0 : index
    %56 = vector.load %arg16[%c0_40, %c0_41] : memref<32x16xbf16, #tpu.memory_space<vmem>>, vector<32x16xbf16>
    %cst_42 = arith.constant dense<0.000000e+00> : vector<8x16xf32>
    %57 = tpu.matmul %55, %56, %cst_42 {dimension_numbers = #tpu.dot_dimension_numbers<[1], [0], [0], [1], [0, 0, 1, 1], [], []>} : vector<8x32xbf16>, vector<32x16xbf16>, vector<8x16xf32> -> vector<8x16xf32>
    %c0_43 = arith.constant 0 : index
    %c0_44 = arith.constant 0 : index
    %58 = vector.load %arg17[%c0_43, %c0_44] : memref<1x16xf32, #tpu.memory_space<vmem>>, vector<1x16xf32>
    %59 = vector.broadcast %58 : vector<1x16xf32> to vector<8x16xf32>
    %60 = arith.addf %57, %59 : vector<8x16xf32>
    %c0_45 = arith.constant 0 : index
    %c0_46 = arith.constant 0 : index
    %61 = vector.load %arg18[%c0_45, %c0_46] : memref<8x32xf32, #tpu.memory_space<vmem>>, vector<8x16xf32>
    tpu.vector_store %arg18[%c0_45, %c0_46], %60 {strides = array<i32>} : memref<8x32xf32, #tpu.memory_space<vmem>>, vector<8x16xf32>,
    %c0_47 = arith.constant 0 : index
    %c16 = arith.constant 16 : index
    %62 = vector.load %arg18[%c0_47, %c16] : memref<8x32xf32, #tpu.memory_space<vmem>>, vector<8x16xf32>
    tpu.vector_store %arg18[%c0_47, %c16], %28 {strides = array<i32>} : memref<8x32xf32, #tpu.memory_space<vmem>>, vector<8x16xf32>,
    return
  }
  func.func @transform_0(%arg0: i32) -> (i32, i32) {
    %c0_i32 = arith.constant 0 : i32
    %c0_i32_0 = arith.constant 0 : i32
    return %arg0, %c0_i32 : i32, i32
  }
  func.func @transform_1(%arg0: i32) -> (i32, i32) {
    %c0_i32 = arith.constant 0 : i32
    %c0_i32_0 = arith.constant 0 : i32
    return %arg0, %c0_i32 : i32, i32
  }
  func.func @transform_2(%arg0: i32) -> (i32, i32) {
    %c0_i32 = arith.constant 0 : i32
    %c0_i32_0 = arith.constant 0 : i32
    return %arg0, %c0_i32 : i32, i32
  }
  func.func @transform_3(%arg0: i32) -> (i32, i32) {
    %c0_i32 = arith.constant 0 : i32
    %c0_i32_0 = arith.constant 0 : i32
    %c0_i32_1 = arith.constant 0 : i32
    return %c0_i32, %c0_i32_0 : i32, i32
  }
  func.func @transform_4(%arg0: i32) -> (i32, i32) {
    %c0_i32 = arith.constant 0 : i32
    %c0_i32_0 = arith.constant 0 : i32
    %c0_i32_1 = arith.constant 0 : i32
    return %c0_i32, %c0_i32_0 : i32, i32
  }
  func.func @transform_5(%arg0: i32) -> (i32, i32) {
    %c0_i32 = arith.constant 0 : i32
    %c0_i32_0 = arith.constant 0 : i32
    %c0_i32_1 = arith.constant 0 : i32
    return %c0_i32, %c0_i32_0 : i32, i32
  }
  func.func @transform_6(%arg0: i32) -> (i32, i32) {
    %c0_i32 = arith.constant 0 : i32
    %c0_i32_0 = arith.constant 0 : i32
    %c0_i32_1 = arith.constant 0 : i32
    return %c0_i32, %c0_i32_0 : i32, i32
  }
  func.func @transform_7(%arg0: i32) -> (i32, i32) {
    %c0_i32 = arith.constant 0 : i32
    %c0_i32_0 = arith.constant 0 : i32
    %c0_i32_1 = arith.constant 0 : i32
    return %c0_i32, %c0_i32_0 : i32, i32
  }
  func.func @transform_8(%arg0: i32) -> (i32, i32) {
    %c0_i32 = arith.constant 0 : i32
    %c0_i32_0 = arith.constant 0 : i32
    %c0_i32_1 = arith.constant 0 : i32
    return %c0_i32, %c0_i32_0 : i32, i32
  }
  func.func @transform_9(%arg0: i32) -> (i32, i32) {
    %c0_i32 = arith.constant 0 : i32
    %c0_i32_0 = arith.constant 0 : i32
    %c0_i32_1 = arith.constant 0 : i32
    return %c0_i32, %c0_i32_0 : i32, i32
  }
  func.func @transform_10(%arg0: i32) -> (i32, i32) {
    %c0_i32 = arith.constant 0 : i32
    %c0_i32_0 = arith.constant 0 : i32
    %c0_i32_1 = arith.constant 0 : i32
    return %c0_i32, %c0_i32_0 : i32, i32
  }
  func.func @transform_11(%arg0: i32) -> (i32, i32) {
    %c0_i32 = arith.constant 0 : i32
    %c0_i32_0 = arith.constant 0 : i32
    %c0_i32_1 = arith.constant 0 : i32
    return %c0_i32, %c0_i32_0 : i32, i32
  }
  func.func @transform_12(%arg0: i32) -> (i32, i32) {
    %c0_i32 = arith.constant 0 : i32
    %c0_i32_0 = arith.constant 0 : i32
    %c0_i32_1 = arith.constant 0 : i32
    return %c0_i32, %c0_i32_0 : i32, i32
  }
  func.func @transform_13(%arg0: i32) -> (i32, i32) {
    %c0_i32 = arith.constant 0 : i32
    %c0_i32_0 = arith.constant 0 : i32
    %c0_i32_1 = arith.constant 0 : i32
    return %c0_i32, %c0_i32_0 : i32, i32
  }
  func.func @transform_14(%arg0: i32) -> (i32, i32) {
    %c0_i32 = arith.constant 0 : i32
    %c0_i32_0 = arith.constant 0 : i32
    %c0_i32_1 = arith.constant 0 : i32
    return %c0_i32, %c0_i32_0 : i32, i32
  }
  func.func @transform_15(%arg0: i32) -> (i32, i32) {
    %c0_i32 = arith.constant 0 : i32
    %c0_i32_0 = arith.constant 0 : i32
    %c0_i32_1 = arith.constant 0 : i32
    return %c0_i32, %c0_i32_0 : i32, i32
  }
  func.func @transform_16(%arg0: i32) -> (i32, i32) {
    %c0_i32 = arith.constant 0 : i32
    %c0_i32_0 = arith.constant 0 : i32
    %c0_i32_1 = arith.constant 0 : i32
    return %c0_i32, %c0_i32_0 : i32, i32
  }
  func.func @transform_17(%arg0: i32) -> (i32, i32) {
    %c0_i32 = arith.constant 0 : i32
    %c0_i32_0 = arith.constant 0 : i32
    return %arg0, %c0_i32 : i32, i32
  }
}

module attributes {stable_mosaic.version = 11 : i64} {
  func.func @_cvae_kernel(%arg0: i32, %arg1: memref<8x16xf32, #tpu.memory_space<vmem>>, %arg2: memref<8x4xf32, #tpu.memory_space<vmem>>, %arg3: memref<8x8xf32, #tpu.memory_space<vmem>>, %arg4: memref<16x32xbf16, #tpu.memory_space<vmem>>, %arg5: memref<4x32xbf16, #tpu.memory_space<vmem>>, %arg6: memref<1x32xf32, #tpu.memory_space<vmem>>, %arg7: memref<32x24xbf16, #tpu.memory_space<vmem>>, %arg8: memref<1x24xf32, #tpu.memory_space<vmem>>, %arg9: memref<24x16xbf16, #tpu.memory_space<vmem>>, %arg10: memref<1x16xf32, #tpu.memory_space<vmem>>, %arg11: memref<8x24xbf16, #tpu.memory_space<vmem>>, %arg12: memref<4x24xbf16, #tpu.memory_space<vmem>>, %arg13: memref<1x24xf32, #tpu.memory_space<vmem>>, %arg14: memref<24x32xbf16, #tpu.memory_space<vmem>>, %arg15: memref<1x32xf32, #tpu.memory_space<vmem>>, %arg16: memref<32x16xbf16, #tpu.memory_space<vmem>>, %arg17: memref<1x16xf32, #tpu.memory_space<vmem>>, %arg18: memref<8x32xf32, #tpu.memory_space<vmem>>) attributes {dimension_semantics = [#tpu.dimension_semantics<parallel>], iteration_bounds = array<i64: 1>, scalar_prefetch = 0 : i64, scratch_operands = 0 : i64, tpu.core_type = #tpu.core_type<tc>, window_params = [{transform_indices = @transform_0, window_bounds = array<i64: 8, 16>}, {transform_indices = @transform_1, window_bounds = array<i64: 8, 4>}, {transform_indices = @transform_2, window_bounds = array<i64: 8, 8>}, {pipeline_mode = #tpu.pipeline_mode<synchronous>, transform_indices = @transform_3, window_bounds = array<i64: 16, 32>}, {pipeline_mode = #tpu.pipeline_mode<synchronous>, transform_indices = @transform_4, window_bounds = array<i64: 4, 32>}, {pipeline_mode = #tpu.pipeline_mode<synchronous>, transform_indices = @transform_5, window_bounds = array<i64: 1, 32>}, {pipeline_mode = #tpu.pipeline_mode<synchronous>, transform_indices = @transform_6, window_bounds = array<i64: 32, 24>}, {pipeline_mode = #tpu.pipeline_mode<synchronous>, transform_indices = @transform_7, window_bounds = array<i64: 1, 24>}, {pipeline_mode = #tpu.pipeline_mode<synchronous>, transform_indices = @transform_8, window_bounds = array<i64: 24, 16>}, {pipeline_mode = #tpu.pipeline_mode<synchronous>, transform_indices = @transform_9, window_bounds = array<i64: 1, 16>}, {pipeline_mode = #tpu.pipeline_mode<synchronous>, transform_indices = @transform_10, window_bounds = array<i64: 8, 24>}, {pipeline_mode = #tpu.pipeline_mode<synchronous>, transform_indices = @transform_11, window_bounds = array<i64: 4, 24>}, {pipeline_mode = #tpu.pipeline_mode<synchronous>, transform_indices = @transform_12, window_bounds = array<i64: 1, 24>}, {pipeline_mode = #tpu.pipeline_mode<synchronous>, transform_indices = @transform_13, window_bounds = array<i64: 24, 32>}, {pipeline_mode = #tpu.pipeline_mode<synchronous>, transform_indices = @transform_14, window_bounds = array<i64: 1, 32>}, {pipeline_mode = #tpu.pipeline_mode<synchronous>, transform_indices = @transform_15, window_bounds = array<i64: 32, 16>}, {pipeline_mode = #tpu.pipeline_mode<synchronous>, transform_indices = @transform_16, window_bounds = array<i64: 1, 16>}, {transform_indices = @transform_17, window_bounds = array<i64: 8, 32>}]} {
    %c0 = arith.constant 0 : index
    %c0_0 = arith.constant 0 : index
    %0 = vector.load %arg1[%c0, %c0_0] : memref<8x16xf32, #tpu.memory_space<vmem>>, vector<8x16xf32>
    %1 = arith.truncf %0 : vector<8x16xf32> to vector<8x16xbf16>
    %c0_1 = arith.constant 0 : index
    %c0_2 = arith.constant 0 : index
    %2 = vector.load %arg2[%c0_1, %c0_2] : memref<8x4xf32, #tpu.memory_space<vmem>>, vector<8x4xf32>
    %3 = arith.truncf %2 : vector<8x4xf32> to vector<8x4xbf16>
    %c0_3 = arith.constant 0 : index
    %c0_4 = arith.constant 0 : index
    %4 = vector.load %arg3[%c0_3, %c0_4] : memref<8x8xf32, #tpu.memory_space<vmem>>, vector<8x8xf32>
    %c0_5 = arith.constant 0 : index
    %c0_6 = arith.constant 0 : index
    %5 = vector.load %arg4[%c0_5, %c0_6] : memref<16x32xbf16, #tpu.memory_space<vmem>>, vector<16x32xbf16>
    %cst = arith.constant dense<0.000000e+00> : vector<8x32xf32>
    %6 = tpu.matmul %1, %5, %cst {dimension_numbers = #tpu.dot_dimension_numbers<[1], [0], [0], [1], [0, 0, 1, 1], [], []>} : vector<8x16xbf16>, vector<16x32xbf16>, vector<8x32xf32> -> vector<8x32xf32>
    %c0_7 = arith.constant 0 : index
    %c0_8 = arith.constant 0 : index
    %7 = vector.load %arg5[%c0_7, %c0_8] : memref<4x32xbf16, #tpu.memory_space<vmem>>, vector<4x32xbf16>
    %cst_9 = arith.constant dense<0.000000e+00> : vector<8x32xf32>
    %8 = tpu.matmul %3, %7, %cst_9 {dimension_numbers = #tpu.dot_dimension_numbers<[1], [0], [0], [1], [0, 0, 1, 1], [], []>} : vector<8x4xbf16>, vector<4x32xbf16>, vector<8x32xf32> -> vector<8x32xf32>
    %9 = arith.addf %6, %8 : vector<8x32xf32>
    %c0_10 = arith.constant 0 : index
    %c0_11 = arith.constant 0 : index
    %10 = vector.load %arg6[%c0_10, %c0_11] : memref<1x32xf32, #tpu.memory_space<vmem>>, vector<1x32xf32>
    %11 = vector.broadcast %10 : vector<1x32xf32> to vector<8x32xf32>
    %12 = arith.addf %9, %11 : vector<8x32xf32>
    %cst_12 = arith.constant 0.000000e+00 : f32
    %13 = vector.broadcast %cst_12 : f32 to vector<8x32xf32>
    %14 = arith.maximumf %12, %13 : vector<8x32xf32>
    %15 = arith.truncf %14 : vector<8x32xf32> to vector<8x32xbf16>
    %c0_13 = arith.constant 0 : index
    %c0_14 = arith.constant 0 : index
    %16 = vector.load %arg7[%c0_13, %c0_14] : memref<32x24xbf16, #tpu.memory_space<vmem>>, vector<32x24xbf16>
    %cst_15 = arith.constant dense<0.000000e+00> : vector<8x24xf32>
    %17 = tpu.matmul %15, %16, %cst_15 {dimension_numbers = #tpu.dot_dimension_numbers<[1], [0], [0], [1], [0, 0, 1, 1], [], []>} : vector<8x32xbf16>, vector<32x24xbf16>, vector<8x24xf32> -> vector<8x24xf32>
    %c0_16 = arith.constant 0 : index
    %c0_17 = arith.constant 0 : index
    %18 = vector.load %arg8[%c0_16, %c0_17] : memref<1x24xf32, #tpu.memory_space<vmem>>, vector<1x24xf32>
    %19 = vector.broadcast %18 : vector<1x24xf32> to vector<8x24xf32>
    %20 = arith.addf %17, %19 : vector<8x24xf32>
    %cst_18 = arith.constant 0.000000e+00 : f32
    %21 = vector.broadcast %cst_18 : f32 to vector<8x24xf32>
    %22 = arith.maximumf %20, %21 : vector<8x24xf32>
    %23 = arith.truncf %22 : vector<8x24xf32> to vector<8x24xbf16>
    %c0_19 = arith.constant 0 : index
    %c0_20 = arith.constant 0 : index
    %24 = vector.load %arg9[%c0_19, %c0_20] : memref<24x16xbf16, #tpu.memory_space<vmem>>, vector<24x16xbf16>
    %cst_21 = arith.constant dense<0.000000e+00> : vector<8x16xf32>
    %25 = tpu.matmul %23, %24, %cst_21 {dimension_numbers = #tpu.dot_dimension_numbers<[1], [0], [0], [1], [0, 0, 1, 1], [], []>} : vector<8x24xbf16>, vector<24x16xbf16>, vector<8x16xf32> -> vector<8x16xf32>
    %c0_22 = arith.constant 0 : index
    %c0_23 = arith.constant 0 : index
    %26 = vector.load %arg10[%c0_22, %c0_23] : memref<1x16xf32, #tpu.memory_space<vmem>>, vector<1x16xf32>
    %27 = vector.broadcast %26 : vector<1x16xf32> to vector<8x16xf32>
    %28 = arith.addf %25, %27 : vector<8x16xf32>
    %29 = vector.extract_strided_slice %28 {offsets = [0, 0], sizes = [8, 8], strides = [1, 1]} : vector<8x16xf32> to vector<8x8xf32>
    %30 = vector.extract_strided_slice %28 {offsets = [0, 8], sizes = [8, 8], strides = [1, 1]} : vector<8x16xf32> to vector<8x8xf32>
    %cst_24 = arith.constant 5.000000e-01 : f32
    %31 = vector.broadcast %cst_24 : f32 to vector<8x8xf32>
    %32 = arith.mulf %30, %31 : vector<8x8xf32>
    %33 = math.exp %32 : vector<8x8xf32>
    %34 = arith.mulf %33, %4 : vector<8x8xf32>
    %35 = arith.addf %29, %34 : vector<8x8xf32>
    %36 = arith.truncf %35 : vector<8x8xf32> to vector<8x8xbf16>
    %c0_25 = arith.constant 0 : index
    %c0_26 = arith.constant 0 : index
    %37 = vector.load %arg11[%c0_25, %c0_26] : memref<8x24xbf16, #tpu.memory_space<vmem>>, vector<8x24xbf16>
    %cst_27 = arith.constant dense<0.000000e+00> : vector<8x24xf32>
    %38 = tpu.matmul %36, %37, %cst_27 {dimension_numbers = #tpu.dot_dimension_numbers<[1], [0], [0], [1], [0, 0, 1, 1], [], []>} : vector<8x8xbf16>, vector<8x24xbf16>, vector<8x24xf32> -> vector<8x24xf32>
    %c0_28 = arith.constant 0 : index
    %c0_29 = arith.constant 0 : index
    %39 = vector.load %arg12[%c0_28, %c0_29] : memref<4x24xbf16, #tpu.memory_space<vmem>>, vector<4x24xbf16>
    %cst_30 = arith.constant dense<0.000000e+00> : vector<8x24xf32>
    %40 = tpu.matmul %3, %39, %cst_30 {dimension_numbers = #tpu.dot_dimension_numbers<[1], [0], [0], [1], [0, 0, 1, 1], [], []>} : vector<8x4xbf16>, vector<4x24xbf16>, vector<8x24xf32> -> vector<8x24xf32>
    %41 = arith.addf %38, %40 : vector<8x24xf32>
    %c0_31 = arith.constant 0 : index
    %c0_32 = arith.constant 0 : index
    %42 = vector.load %arg13[%c0_31, %c0_32] : memref<1x24xf32, #tpu.memory_space<vmem>>, vector<1x24xf32>
    %43 = vector.broadcast %42 : vector<1x24xf32> to vector<8x24xf32>
    %44 = arith.addf %41, %43 : vector<8x24xf32>
    %cst_33 = arith.constant 0.000000e+00 : f32
    %45 = vector.broadcast %cst_33 : f32 to vector<8x24xf32>
    %46 = arith.maximumf %44, %45 : vector<8x24xf32>
    %47 = arith.truncf %46 : vector<8x24xf32> to vector<8x24xbf16>
    %c0_34 = arith.constant 0 : index
    %c0_35 = arith.constant 0 : index
    %48 = vector.load %arg14[%c0_34, %c0_35] : memref<24x32xbf16, #tpu.memory_space<vmem>>, vector<24x32xbf16>
    %cst_36 = arith.constant dense<0.000000e+00> : vector<8x32xf32>
    %49 = tpu.matmul %47, %48, %cst_36 {dimension_numbers = #tpu.dot_dimension_numbers<[1], [0], [0], [1], [0, 0, 1, 1], [], []>} : vector<8x24xbf16>, vector<24x32xbf16>, vector<8x32xf32> -> vector<8x32xf32>
    %c0_37 = arith.constant 0 : index
    %c0_38 = arith.constant 0 : index
    %50 = vector.load %arg15[%c0_37, %c0_38] : memref<1x32xf32, #tpu.memory_space<vmem>>, vector<1x32xf32>
    %51 = vector.broadcast %50 : vector<1x32xf32> to vector<8x32xf32>
    %52 = arith.addf %49, %51 : vector<8x32xf32>
    %cst_39 = arith.constant 0.000000e+00 : f32
    %53 = vector.broadcast %cst_39 : f32 to vector<8x32xf32>
    %54 = arith.maximumf %52, %53 : vector<8x32xf32>
    %55 = arith.truncf %54 : vector<8x32xf32> to vector<8x32xbf16>
    %c0_40 = arith.constant 0 : index
    %c0_41 = arith.constant 0 : index
    %56 = vector.load %arg16[%c0_40, %c0_41] : memref<32x16xbf16, #tpu.memory_space<vmem>>, vector<32x16xbf16>
    %cst_42 = arith.constant dense<0.000000e+00> : vector<8x16xf32>
    %57 = tpu.matmul %55, %56, %cst_42 {dimension_numbers = #tpu.dot_dimension_numbers<[1], [0], [0], [1], [0, 0, 1, 1], [], []>} : vector<8x32xbf16>, vector<32x16xbf16>, vector<8x16xf32> -> vector<8x16xf32>
    %c0_43 = arith.constant 0 : index
    %c0_44 = arith.constant 0 : index
    %58 = vector.load %arg17[%c0_43, %c0_44] : memref<1x16xf32, #tpu.memory_space<vmem>>, vector<1x16xf32>
    %59 = vector.broadcast %58 : vector<1x16xf32> to vector<8x16xf32>
    %60 = arith.addf %57, %59 : vector<8x16xf32>
    %c0_45 = arith.constant 0 : index
    %c0_46 = arith.constant 0 : index
    %61 = vector.load %arg18[%c0_45, %c0_46] : memref<8x32xf32, #tpu.memory_space<vmem>>, vector<8x16xf32>
    tpu.vector_store %arg18[%c0_45, %c0_46], %60 {strides = array<i32>} : memref<8x32xf32, #tpu.memory_space<vmem>>, vector<8x16xf32>,
    %c0_47 = arith.constant 0 : index
    %c16 = arith.constant 16 : index
    %62 = vector.load %arg18[%c0_47, %c16] : memref<8x32xf32, #tpu.memory_space<vmem>>, vector<8x16xf32>
    tpu.vector_store %arg18[%c0_47, %c16], %28 {strides = array<i32>} : memref<8x32xf32, #tpu.memory_space<vmem>>, vector<8x16xf32>,
    return
  }
  func.func @transform_0(%arg0: i32) -> (i32, i32) {
    %c0_i32 = arith.constant 0 : i32
    %c0_i32_0 = arith.constant 0 : i32
    return %arg0, %c0_i32 : i32, i32
  }
  func.func @transform_1(%arg0: i32) -> (i32, i32) {
    %c0_i32 = arith.constant 0 : i32
    %c0_i32_0 = arith.constant 0 : i32
    return %arg0, %c0_i32 : i32, i32
  }
  func.func @transform_2(%arg0: i32) -> (i32, i32) {
    %c0_i32 = arith.constant 0 : i32
    %c0_i32_0 = arith.constant 0 : i32
    return %arg0, %c0_i32 : i32, i32
  }
  func.func @transform_3(%arg0: i32) -> (i32, i32) {
    %c0_i32 = arith.constant 0 : i32
    %c0_i32_0 = arith.constant 0 : i32
    %c0_i32_1 = arith.constant 0 : i32
    return %c0_i32, %c0_i32_0 : i32, i32
  }
  func.func @transform_4(%arg0: i32) -> (i32, i32) {
    %c0_i32 = arith.constant 0 : i32
    %c0_i32_0 = arith.constant 0 : i32
    %c0_i32_1 = arith.constant 0 : i32
    return %c0_i32, %c0_i32_0 : i32, i32
  }
  func.func @transform_5(%arg0: i32) -> (i32, i32) {
    %c0_i32 = arith.constant 0 : i32
    %c0_i32_0 = arith.constant 0 : i32
    %c0_i32_1 = arith.constant 0 : i32
    return %c0_i32, %c0_i32_0 : i32, i32
  }
  func.func @transform_6(%arg0: i32) -> (i32, i32) {
    %c0_i32 = arith.constant 0 : i32
    %c0_i32_0 = arith.constant 0 : i32
    %c0_i32_1 = arith.constant 0 : i32
    return %c0_i32, %c0_i32_0 : i32, i32
  }
  func.func @transform_7(%arg0: i32) -> (i32, i32) {
    %c0_i32 = arith.constant 0 : i32
    %c0_i32_0 = arith.constant 0 : i32
    %c0_i32_1 = arith.constant 0 : i32
    return %c0_i32, %c0_i32_0 : i32, i32
  }
  func.func @transform_8(%arg0: i32) -> (i32, i32) {
    %c0_i32 = arith.constant 0 : i32
    %c0_i32_0 = arith.constant 0 : i32
    %c0_i32_1 = arith.constant 0 : i32
    return %c0_i32, %c0_i32_0 : i32, i32
  }
  func.func @transform_9(%arg0: i32) -> (i32, i32) {
    %c0_i32 = arith.constant 0 : i32
    %c0_i32_0 = arith.constant 0 : i32
    %c0_i32_1 = arith.constant 0 : i32
    return %c0_i32, %c0_i32_0 : i32, i32
  }
  func.func @transform_10(%arg0: i32) -> (i32, i32) {
    %c0_i32 = arith.constant 0 : i32
    %c0_i32_0 = arith.constant 0 : i32
    %c0_i32_1 = arith.constant 0 : i32
    return %c0_i32, %c0_i32_0 : i32, i32
  }
  func.func @transform_11(%arg0: i32) -> (i32, i32) {
    %c0_i32 = arith.constant 0 : i32
    %c0_i32_0 = arith.constant 0 : i32
    %c0_i32_1 = arith.constant 0 : i32
    return %c0_i32, %c0_i32_0 : i32, i32
  }
  func.func @transform_12(%arg0: i32) -> (i32, i32) {
    %c0_i32 = arith.constant 0 : i32
    %c0_i32_0 = arith.constant 0 : i32
    %c0_i32_1 = arith.constant 0 : i32
    return %c0_i32, %c0_i32_0 : i32, i32
  }
  func.func @transform_13(%arg0: i32) -> (i32, i32) {
    %c0_i32 = arith.constant 0 : i32
    %c0_i32_0 = arith.constant 0 : i32
    %c0_i32_1 = arith.constant 0 : i32
    return %c0_i32, %c0_i32_0 : i32, i32
  }
  func.func @transform_14(%arg0: i32) -> (i32, i32) {
    %c0_i32 = arith.constant 0 : i32
    %c0_i32_0 = arith.constant 0 : i32
    %c0_i32_1 = arith.constant 0 : i32
    return %c0_i32, %c0_i32_0 : i32, i32
  }
  func.func @transform_15(%arg0: i32) -> (i32, i32) {
    %c0_i32 = arith.constant 0 : i32
    %c0_i32_0 = arith.constant 0 : i32
    %c0_i32_1 = arith.constant 0 : i32
    return %c0_i32, %c0_i32_0 : i32, i32
  }
  func.func @transform_16(%arg0: i32) -> (i32, i32) {
    %c0_i32 = arith.constant 0 : i32
    %c0_i32_0 = arith.constant 0 : i32
    %c0_i32_1 = arith.constant 0 : i32
    return %c0_i32, %c0_i32_0 : i32, i32
  }
  func.func @transform_17(%arg0: i32) -> (i32, i32) {
    %c0_i32 = arith.constant 0 : i32
    %c0_i32_0 = arith.constant 0 : i32
    return %arg0, %c0_i32 : i32, i32
  }
}

</mosaic_0001>

<llo_original>
// kernel: tpu_custom_call.1
$region0: #{tpu_custom_call.1}
  #allocation0 [shape = 'u32[]', space=smem, size = 0x4, offset = 0x4, fixed_abs, tag = 'smem constant byte address 0x4 - core index']
  #allocation1 [shape = 'u32[144,128]{1,0:T(1,128)}', space=vmem, size = 0x12000, scoped, tag = 'internal scratch']
  %s0 = inlined_call_operand.vmem [shape: f32[8,16], index: 0, kind: input, shape index: {}]
  %s1 = inlined_call_operand.vmem [shape: f32[8,4], index: 1, kind: input, shape index: {}]
  %s2 = inlined_call_operand.vmem [shape: f32[8,8], index: 2, kind: input, shape index: {}]
  %s3 = inlined_call_operand.vmem [shape: bf16[16,32], index: 3, kind: input, shape index: {}]
  %s4 = inlined_call_operand.vmem [shape: bf16[4,32], index: 4, kind: input, shape index: {}]
  %s5 = inlined_call_operand.vmem [shape: f32[1,32], index: 5, kind: input, shape index: {}]
  %s6 = inlined_call_operand.vmem [shape: bf16[32,24], index: 6, kind: input, shape index: {}]
  %s7 = inlined_call_operand.vmem [shape: f32[1,24], index: 7, kind: input, shape index: {}]
  %s8 = inlined_call_operand.vmem [shape: bf16[24,16], index: 8, kind: input, shape index: {}]
  %s9 = inlined_call_operand.vmem [shape: f32[1,16], index: 9, kind: input, shape index: {}]
  %s10 = inlined_call_operand.vmem [shape: bf16[8,24], index: 10, kind: input, shape index: {}]
  %s11 = inlined_call_operand.vmem [shape: bf16[4,24], index: 11, kind: input, shape index: {}]
  %s12 = inlined_call_operand.vmem [shape: f32[1,24], index: 12, kind: input, shape index: {}]
  %s13 = inlined_call_operand.vmem [shape: bf16[24,32], index: 13, kind: input, shape index: {}]
  %s14 = inlined_call_operand.vmem [shape: f32[1,32], index: 14, kind: input, shape index: {}]
  %s15 = inlined_call_operand.vmem [shape: bf16[32,16], index: 15, kind: input, shape index: {}]
  %s16 = inlined_call_operand.vmem [shape: f32[1,16], index: 16, kind: input, shape index: {}]
  %s17 = inlined_call_operand.hbm [shape: f32[8,32], index: 17, kind: output, shape index: {}]
  %s18 = sld [smem:[#allocation0]]
  $region78: #{tpu_custom_call.1} parent=0
    _
  %s20 = ssub.s32 1, %s18
  %s21 = scalar_select 0, %s20, %s18
  $region1: #{tpu_custom_call.1} parent=0
    #allocation2 [shape = 'u8[4096]{0}', space=vmem, size = 0x1000, scoped, tag = 'output window, operand 0, single buffered']
    #allocation3 [shape = 's32[1]{0}', space=sflag, size = 0x4, scoped, tag = 'scoped memory for tpu_custom_call.1']
    %22 = vsyncpa [#allocation3], 0
    // Predicated region
    $region2: #{tpu_custom_call.1} parent=1 // pred_check
      _
    $region3: #{tpu_custom_call.1} parent=1 // pred_check_branch
      %24 = sbr.rel (0) target = $region5
    $region4: #{tpu_custom_call.1} parent=1 // pred_region
      _
    $region5: #{tpu_custom_call.1} parent=1 // pred_fallthru
      _
    // Predicated region
    $region6: #{tpu_custom_call.1} parent=1 // pred_check
      _
    $region7: #{tpu_custom_call.1} parent=1 // pred_check_branch
      %26 = sbr.rel (0) target = $region9
    $region8: #{tpu_custom_call.1} parent=1 // pred_region
      _
    $region9: #{tpu_custom_call.1} parent=1 // pred_fallthru
      _
    // Predicated region
    $region10: #{tpu_custom_call.1} parent=1 // pred_check
      _
    $region11: #{tpu_custom_call.1} parent=1 // pred_check_branch
      %28 = sbr.rel (0) target = $region13
    $region12: #{tpu_custom_call.1} parent=1 // pred_region
      _
    $region13: #{tpu_custom_call.1} parent=1 // pred_fallthru
      _
    // Predicated region
    $region14: #{tpu_custom_call.1} parent=1 // pred_check
      _
    $region15: #{tpu_custom_call.1} parent=1 // pred_check_branch
      %30 = sbr.rel (0) target = $region17
    $region16: #{tpu_custom_call.1} parent=1 // pred_region
      _
    $region17: #{tpu_custom_call.1} parent=1 // pred_fallthru
      _
    // Predicated region
    $region18: #{tpu_custom_call.1} parent=1 // pred_check
      _
    $region19: #{tpu_custom_call.1} parent=1 // pred_check_branch
      %32 = sbr.rel (0) target = $region21
    $region20: #{tpu_custom_call.1} parent=1 // pred_region
      _
    $region21: #{tpu_custom_call.1} parent=1 // pred_fallthru
      _
    // Predicated region
    $region22: #{tpu_custom_call.1} parent=1 // pred_check
      _
    $region23: #{tpu_custom_call.1} parent=1 // pred_check_branch
      %34 = sbr.rel (0) target = $region25
    $region24: #{tpu_custom_call.1} parent=1 // pred_region
      _
    $region25: #{tpu_custom_call.1} parent=1 // pred_fallthru
      _
    // Predicated region
    $region26: #{tpu_custom_call.1} parent=1 // pred_check
      _
    $region27: #{tpu_custom_call.1} parent=1 // pred_check_branch
      %36 = sbr.rel (0) target = $region29
    $region28: #{tpu_custom_call.1} parent=1 // pred_region
      _
    $region29: #{tpu_custom_call.1} parent=1 // pred_fallthru
      _
    // Predicated region
    $region30: #{tpu_custom_call.1} parent=1 // pred_check
      _
    $region31: #{tpu_custom_call.1} parent=1 // pred_check_branch
      %38 = sbr.rel (0) target = $region33
    $region32: #{tpu_custom_call.1} parent=1 // pred_region
      _
    $region33: #{tpu_custom_call.1} parent=1 // pred_fallthru
      _
    // Predicated region
    $region34: #{tpu_custom_call.1} parent=1 // pred_check
      _
    $region35: #{tpu_custom_call.1} parent=1 // pred_check_branch
      %40 = sbr.rel (0) target = $region37
    $region36: #{tpu_custom_call.1} parent=1 // pred_region
      _
    $region37: #{tpu_custom_call.1} parent=1 // pred_fallthru
      _
    // Predicated region
    $region38: #{tpu_custom_call.1} parent=1 // pred_check
      _
    $region39: #{tpu_custom_call.1} parent=1 // pred_check_branch
      %42 = sbr.rel (0) target = $region41
    $region40: #{tpu_custom_call.1} parent=1 // pred_region
      _
    $region41: #{tpu_custom_call.1} parent=1 // pred_fallthru
      _
    // Predicated region
    $region42: #{tpu_custom_call.1} parent=1 // pred_check
      _
    $region43: #{tpu_custom_call.1} parent=1 // pred_check_branch
      %44 = sbr.rel (0) target = $region45
    $region44: #{tpu_custom_call.1} parent=1 // pred_region
      _
    $region45: #{tpu_custom_call.1} parent=1 // pred_fallthru
      _
    // Predicated region
    $region46: #{tpu_custom_call.1} parent=1 // pred_check
      _
    $region47: #{tpu_custom_call.1} parent=1 // pred_check_branch
      %46 = sbr.rel (0) target = $region49
    $region48: #{tpu_custom_call.1} parent=1 // pred_region
      _
    $region49: #{tpu_custom_call.1} parent=1 // pred_fallthru
      _
    // Predicated region
    $region50: #{tpu_custom_call.1} parent=1 // pred_check
      _
    $region51: #{tpu_custom_call.1} parent=1 // pred_check_branch
      %48 = sbr.rel (0) target = $region53
    $region52: #{tpu_custom_call.1} parent=1 // pred_region
      _
    $region53: #{tpu_custom_call.1} parent=1 // pred_fallthru
      _
    // Predicated region
    $region54: #{tpu_custom_call.1} parent=1 // pred_check
      _
    $region55: #{tpu_custom_call.1} parent=1 // pred_check_branch
      %50 = sbr.rel (0) target = $region57
    $region56: #{tpu_custom_call.1} parent=1 // pred_region
      _
    $region57: #{tpu_custom_call.1} parent=1 // pred_fallthru
      _
    // Predicated region
    $region58: #{tpu_custom_call.1} parent=1 // pred_check
      _
    $region59: #{tpu_custom_call.1} parent=1 // pred_check_branch
      %52 = sbr.rel (0) target = $region61
    $region60: #{tpu_custom_call.1} parent=1 // pred_region
      _
    $region61: #{tpu_custom_call.1} parent=1 // pred_fallthru
      _
    // Predicated region
    $region62: #{tpu_custom_call.1} parent=1 // pred_check
      _
    $region63: #{tpu_custom_call.1} parent=1 // pred_check_branch
      %54 = sbr.rel (0) target = $region65
    $region64: #{tpu_custom_call.1} parent=1 // pred_region
      _
    $region65: #{tpu_custom_call.1} parent=1 // pred_fallthru
      _
    // Predicated region
    $region66: #{tpu_custom_call.1} parent=1 // pred_check
      _
    $region67: #{tpu_custom_call.1} parent=1 // pred_check_branch
      %56 = sbr.rel (0) target = $region69
    $region68: #{tpu_custom_call.1} parent=1 // pred_region
      _
    $region69: #{tpu_custom_call.1} parent=1 // pred_fallthru
      _
    %v58 = vld [vmem:[%s0] sm:$0xff]
    %v59 = vpack.c.bf16 %v58, %v58
    %v60 = vld [vmem:[%s1] sm:$0xff]
    %v61 = vpack.c.bf16 %v60, %v60
    %v62 = vld [vmem:[%s2] sm:$0xff]
    %v63 = vld [vmem:[%s3] sm:$0xf]
    %v64 = vld [vmem:[%s3 + $0x4] sm:$0xf]
    %v65 = vld [vmem:[%s4] sm:$0x3]
    %vm66 = vcmask 31744
    %v68 = vsel %vm66, %v61, 0
    %vm70 = vcmask 1041408
    %v72 = vsel %vm70, %v65, 0
    %74 = vmatprep.subr.bf16.mxu0 0
    %75 = vmatpush1.bf16.msra.mxu0 %v72
    %76 = vmatprep.subr.bf16.mxu0 0
    %77 = vmatpush1.bf16.msra.mxu0 0
    %78 = vmatprep.subr.bf16.mxu0 0
    %79 = vmatpush1.bf16.msra.mxu0 0
    %80 = vmatprep.subr.bf16.mxu0 0
    %81 = vmatpush1.bf16.msra.mxu0 0
    %82 = vmatprep.subr.bf16.mxu0 0
    %83 = vmatpush1.bf16.msra.mxu0 0
    %84 = vmatprep.subr.bf16.mxu0 0
    %85 = vmatpush1.bf16.msra.mxu0 0
    %86 = vmatprep.subr.bf16.mxu0 0
    %87 = vmatpush1.bf16.msra.mxu0 0
    %88 = vmatprep.subr.bf16.mxu0 0
    %89 = vmatpush1.bf16.msra.mxu0 0
    %90 = vmatprep.subr.bf16.mxu0 0
    %91 = vmatpush1.bf16.msra.mxu0 0
    %92 = vmatprep.subr.bf16.mxu0 0
    %93 = vmatpush1.bf16.msra.mxu0 0
    %94 = vmatprep.subr.bf16.mxu0 0
    %95 = vmatpush1.bf16.msra.mxu0 0
    %96 = vmatprep.subr.bf16.mxu0 0
    %97 = vmatpush1.bf16.msra.mxu0 0
    %98 = vmatprep.subr.bf16.mxu0 0
    %99 = vmatpush1.bf16.msra.mxu0 0
    %100 = vmatprep.subr.bf16.mxu0 0
    %101 = vmatpush1.bf16.msra.mxu0 0
    %102 = vmatprep.subr.bf16.mxu0 0
    %103 = vmatpush1.bf16.msra.mxu0 0
    %104 = vmatprep.subr.bf16.mxu0 0
    %105 = vmatpush1.bf16.msra.mxu0 0
    %106 = vmatprep.mubr.bf16.mxu0 0
    %107 = vmatmul.mubr.bf16.gmra.mrb[0].mxu0 %v68
    %v108 = vpop.f32.mrb[0].mxu0
    %v109 = vadd.f32 0.0, %v108
    %v110 = vpop.f32.mrb[0].mxu0
    %v111 = vpop.f32.mrb[0].mxu0
    %v112 = vpop.f32.mrb[0].mxu0
    %113 = vdwg.mxu0
    %v116 = vunpack.c.l.b16 %v63
    %v117 = vunpack.c.l.b16 %v64
    %v118 = vpack.c.b16 %v117, %v116
    %vm120 = vcmask 130048
    %v122 = vsel %vm120, %v59, 0
    %124 = vmatprep.subr.bf16.mxu0 0
    %125 = vmatpush1.bf16.msra.mxu0 %v118
    %126 = vmatprep.subr.bf16.mxu0 0
    %127 = vmatpush1.bf16.msra.mxu0 0
    %128 = vmatprep.subr.bf16.mxu0 0
    %129 = vmatpush1.bf16.msra.mxu0 0
    %130 = vmatprep.subr.bf16.mxu0 0
    %131 = vmatpush1.bf16.msra.mxu0 0
    %132 = vmatprep.subr.bf16.mxu0 0
    %133 = vmatpush1.bf16.msra.mxu0 0
    %134 = vmatprep.subr.bf16.mxu0 0
    %135 = vmatpush1.bf16.msra.mxu0 0
    %136 = vmatprep.subr.bf16.mxu0 0
    %137 = vmatpush1.bf16.msra.mxu0 0
    %138 = vmatprep.subr.bf16.mxu0 0
    %139 = vmatpush1.bf16.msra.mxu0 0
    %140 = vmatprep.subr.bf16.mxu0 0
    %141 = vmatpush1.bf16.msra.mxu0 0
    %142 = vmatprep.subr.bf16.mxu0 0
    %143 = vmatpush1.bf16.msra.mxu0 0
    %144 = vmatprep.subr.bf16.mxu0 0
    %145 = vmatpush1.bf16.msra.mxu0 0
    %146 = vmatprep.subr.bf16.mxu0 0
    %147 = vmatpush1.bf16.msra.mxu0 0
    %148 = vmatprep.subr.bf16.mxu0 0
    %149 = vmatpush1.bf16.msra.mxu0 0
    %150 = vmatprep.subr.bf16.mxu0 0
    %151 = vmatpush1.bf16.msra.mxu0 0
    %152 = vmatprep.subr.bf16.mxu0 0
    %153 = vmatpush1.bf16.msra.mxu0 0
    %154 = vmatprep.subr.bf16.mxu0 0
    %155 = vmatpush1.bf16.msra.mxu0 0
    %156 = vmatprep.mubr.bf16.mxu0 0
    %157 = vmatmul.mubr.bf16.gmra.mrb[0].mxu0 %v122
    %v158 = vpop.f32.mrb[0].mxu0
    %v159 = vadd.f32 %v109, %v158
    %v160 = vpop.f32.mrb[0].mxu0
    %v161 = vpop.f32.mrb[0].mxu0
    %v162 = vpop.f32.mrb[0].mxu0
    %163 = vdwg.mxu0
    %v164 = vld [vmem:[%s5] sm:$0x1]
    %v166 = vlaneseq
    %v167 = vshrl.u32 %v166, 7
    %v168 = vsub.s32 0, %v167
    %v169 = vrot.slane %v164, %v168
    %v171 = vadd.f32 %v159, %v169
    %v172 = vmax.f32 %v171, 0.0
    %v173 = vpack.c.bf16 %v172, %v172
    %v174 = vld [vmem:[%s6] sm:$0xf]
    %v175 = vld [vmem:[%s6 + $0x4] sm:$0xf]
    %v176 = vld [vmem:[%s6 + $0x8] sm:$0xf]
    %v177 = vld [vmem:[%s6 + $0xc] sm:$0xf]
    %v178 = vld [vmem:[%s7] sm:$0x1]
    %v180 = vlaneseq
    %v181 = vshrl.u32 %v180, 7
    %v182 = vsub.s32 0, %v181
    %v183 = vrot.slane %v178, %v182
    %v189 = vunpack.c.l.b16 %v174
    %v190 = vunpack.c.l.b16 %v175
    %v191 = vunpack.c.l.b16 %v176
    %v192 = vunpack.c.l.b16 %v177
    %v193 = vpack.c.b16 %v190, %v189
    %v194 = vpack.c.b16 %v192, %v191
    %vm197 = vcmask 261120
    %v199 = vsel %vm197, %v173, 0
    %201 = vmatprep.subr.bf16.mxu0 0
    %202 = vmatpush1.bf16.msra.mxu0 %v193
    %203 = vmatprep.subr.bf16.mxu0 0
    %204 = vmatpush1.bf16.msra.mxu0 %v194
    %205 = vmatprep.subr.bf16.mxu0 0
    %206 = vmatpush1.bf16.msra.mxu0 0
    %207 = vmatprep.subr.bf16.mxu0 0
    %208 = vmatpush1.bf16.msra.mxu0 0
    %209 = vmatprep.subr.bf16.mxu0 0
    %210 = vmatpush1.bf16.msra.mxu0 0
    %211 = vmatprep.subr.bf16.mxu0 0
    %212 = vmatpush1.bf16.msra.mxu0 0
    %213 = vmatprep.subr.bf16.mxu0 0
    %214 = vmatpush1.bf16.msra.mxu0 0
    %215 = vmatprep.subr.bf16.mxu0 0
    %216 = vmatpush1.bf16.msra.mxu0 0
    %217 = vmatprep.subr.bf16.mxu0 0
    %218 = vmatpush1.bf16.msra.mxu0 0
    %219 = vmatprep.subr.bf16.mxu0 0
    %220 = vmatpush1.bf16.msra.mxu0 0
    %221 = vmatprep.subr.bf16.mxu0 0
    %222 = vmatpush1.bf16.msra.mxu0 0
    %223 = vmatprep.subr.bf16.mxu0 0
    %224 = vmatpush1.bf16.msra.mxu0 0
    %225 = vmatprep.subr.bf16.mxu0 0
    %226 = vmatpush1.bf16.msra.mxu0 0
    %227 = vmatprep.subr.bf16.mxu0 0
    %228 = vmatpush1.bf16.msra.mxu0 0
    %229 = vmatprep.subr.bf16.mxu0 0
    %230 = vmatpush1.bf16.msra.mxu0 0
    %231 = vmatprep.subr.bf16.mxu0 0
    %232 = vmatpush1.bf16.msra.mxu0 0
    %233 = vmatprep.mubr.bf16.mxu0 0
    %234 = vmatmul.mubr.bf16.gmra.mrb[0].mxu0 %v199
    %v235 = vpop.f32.mrb[0].mxu0
    %v236 = vadd.f32 %v183, %v235
    %v237 = vpop.f32.mrb[0].mxu0
    %v238 = vpop.f32.mrb[0].mxu0
    %v239 = vpop.f32.mrb[0].mxu0
    %240 = vdwg.mxu0
    %v241 = vmax.f32 %v236, 0.0
    %v242 = vpack.c.bf16 %v241, %v241
    %v243 = vld [vmem:[%s8] sm:$0xf]
    %v244 = vld [vmem:[%s8 + $0x4] sm:$0xf]
    %v245 = vld [vmem:[%s8 + $0x8] sm:$0xf]
    %v246 = vld [vmem:[%s9] sm:$0x1]
    %v248 = vlaneseq
    %v249 = vshrl.u32 %v248, 7
    %v250 = vsub.s32 0, %v249
    %v251 = vrot.slane %v246, %v250
    %v256 = vunpack.c.l.b16 %v243
    %v257 = vunpack.c.l.b16 %v244
    %v258 = vunpack.c.l.b16 %v245
    %v259 = vpack.c.b16 %v257, %v256
    %v260 = vpack.c.b16 %v258, %v258
    %vm262 = vcmask 195584
    %v264 = vsel %vm262, %v242, 0
    %vm266 = vcmask 1043456
    %v268 = vsel %vm266, %v260, 0
    %270 = vmatprep.subr.bf16.mxu0 0
    %271 = vmatpush1.bf16.msra.mxu0 %v259
    %272 = vmatprep.subr.bf16.mxu0 0
    %273 = vmatpush1.bf16.msra.mxu0 %v268
    %274 = vmatprep.subr.bf16.mxu0 0
    %275 = vmatpush1.bf16.msra.mxu0 0
    %276 = vmatprep.subr.bf16.mxu0 0
    %277 = vmatpush1.bf16.msra.mxu0 0
    %278 = vmatprep.subr.bf16.mxu0 0
    %279 = vmatpush1.bf16.msra.mxu0 0
    %280 = vmatprep.subr.bf16.mxu0 0
    %281 = vmatpush1.bf16.msra.mxu0 0
    %282 = vmatprep.subr.bf16.mxu0 0
    %283 = vmatpush1.bf16.msra.mxu0 0
    %284 = vmatprep.subr.bf16.mxu0 0
    %285 = vmatpush1.bf16.msra.mxu0 0
    %286 = vmatprep.subr.bf16.mxu0 0
    %287 = vmatpush1.bf16.msra.mxu0 0
    %288 = vmatprep.subr.bf16.mxu0 0
    %289 = vmatpush1.bf16.msra.mxu0 0
    %290 = vmatprep.subr.bf16.mxu0 0
    %291 = vmatpush1.bf16.msra.mxu0 0
    %292 = vmatprep.subr.bf16.mxu0 0
    %293 = vmatpush1.bf16.msra.mxu0 0
    %294 = vmatprep.subr.bf16.mxu0 0
    %295 = vmatpush1.bf16.msra.mxu0 0
    %296 = vmatprep.subr.bf16.mxu0 0
    %297 = vmatpush1.bf16.msra.mxu0 0
    %298 = vmatprep.subr.bf16.mxu0 0
    %299 = vmatpush1.bf16.msra.mxu0 0
    %300 = vmatprep.subr.bf16.mxu0 0
    %301 = vmatpush1.bf16.msra.mxu0 0
    %302 = vmatprep.mubr.bf16.mxu0 0
    %303 = vmatmul.mubr.bf16.gmra.mrb[0].mxu0 %v264
    %v304 = vpop.f32.mrb[0].mxu0
    %v305 = vadd.f32 %v251, %v304
    %v306 = vpop.f32.mrb[0].mxu0
    %v307 = vpop.f32.mrb[0].mxu0
    %v308 = vpop.f32.mrb[0].mxu0
    %309 = vdwg.mxu0
    %v310 = vmul.f32 %v305, 0.5
    %v311 = vmul.f32 %v310, 1.442695
    %v312 = vpow.pop %v311
    %314 = vrot.lane.b32.xlu0 %v62, 8
    %v315 = vpop.permute.xlu0 %314
    %v317 = vmul.f32 %v312, %v315
    %319 = vrot.lane.b32.xlu0 %v317, 120
    %v320 = vpop.permute.xlu0 %319
    %v322 = vadd.f32 %v305, %v320
    %v323 = vpack.c.bf16 %v322, %v322
    %v324 = vld [vmem:[%s10] sm:$0xf]
    %v325 = vld [vmem:[%s11] sm:$0x3]
    %v327 = vsel %vm70, %v325, 0
    %329 = vmatprep.subr.bf16.mxu0 0
    %330 = vmatpush1.bf16.msra.mxu0 %v327
    %331 = vmatprep.subr.bf16.mxu0 0
    %332 = vmatpush1.bf16.msra.mxu0 0
    %333 = vmatprep.subr.bf16.mxu0 0
    %334 = vmatpush1.bf16.msra.mxu0 0
    %335 = vmatprep.subr.bf16.mxu0 0
    %336 = vmatpush1.bf16.msra.mxu0 0
    %337 = vmatprep.subr.bf16.mxu0 0
    %338 = vmatpush1.bf16.msra.mxu0 0
    %339 = vmatprep.subr.bf16.mxu0 0
    %340 = vmatpush1.bf16.msra.mxu0 0
    %341 = vmatprep.subr.bf16.mxu0 0
    %342 = vmatpush1.bf16.msra.mxu0 0
    %343 = vmatprep.subr.bf16.mxu0 0
    %344 = vmatpush1.bf16.msra.mxu0 0
    %345 = vmatprep.subr.bf16.mxu0 0
    %346 = vmatpush1.bf16.msra.mxu0 0
    %347 = vmatprep.subr.bf16.mxu0 0
    %348 = vmatpush1.bf16.msra.mxu0 0
    %349 = vmatprep.subr.bf16.mxu0 0
    %350 = vmatpush1.bf16.msra.mxu0 0
    %351 = vmatprep.subr.bf16.mxu0 0
    %352 = vmatpush1.bf16.msra.mxu0 0
    %353 = vmatprep.subr.bf16.mxu0 0
    %354 = vmatpush1.bf16.msra.mxu0 0
    %355 = vmatprep.subr.bf16.mxu0 0
    %356 = vmatpush1.bf16.msra.mxu0 0
    %357 = vmatprep.subr.bf16.mxu0 0
    %358 = vmatpush1.bf16.msra.mxu0 0
    %359 = vmatprep.subr.bf16.mxu0 0
    %360 = vmatpush1.bf16.msra.mxu0 0
    %361 = vmatprep.mubr.bf16.mxu0 0
    %362 = vmatmul.mubr.bf16.gmra.mrb[0].mxu0 %v68
    %v363 = vpop.f32.mrb[0].mxu0
    %v364 = vadd.f32 0.0, %v363
    %v365 = vpop.f32.mrb[0].mxu0
    %v366 = vpop.f32.mrb[0].mxu0
    %v367 = vpop.f32.mrb[0].mxu0
    %368 = vdwg.mxu0
    %vm369 = vcmask 64512
    %v371 = vsel %vm369, %v323, 0
    %v374 = vsel %vm266, %v324, 0
    %376 = vmatprep.subr.bf16.mxu0 0
    %377 = vmatpush1.bf16.msra.mxu0 %v374
    %378 = vmatprep.subr.bf16.mxu0 0
    %379 = vmatpush1.bf16.msra.mxu0 0
    %380 = vmatprep.subr.bf16.mxu0 0
    %381 = vmatpush1.bf16.msra.mxu0 0
    %382 = vmatprep.subr.bf16.mxu0 0
    %383 = vmatpush1.bf16.msra.mxu0 0
    %384 = vmatprep.subr.bf16.mxu0 0
    %385 = vmatpush1.bf16.msra.mxu0 0
    %386 = vmatprep.subr.bf16.mxu0 0
    %387 = vmatpush1.bf16.msra.mxu0 0
    %388 = vmatprep.subr.bf16.mxu0 0
    %389 = vmatpush1.bf16.msra.mxu0 0
    %390 = vmatprep.subr.bf16.mxu0 0
    %391 = vmatpush1.bf16.msra.mxu0 0
    %392 = vmatprep.subr.bf16.mxu0 0
    %393 = vmatpush1.bf16.msra.mxu0 0
    %394 = vmatprep.subr.bf16.mxu0 0
    %395 = vmatpush1.bf16.msra.mxu0 0
    %396 = vmatprep.subr.bf16.mxu0 0
    %397 = vmatpush1.bf16.msra.mxu0 0
    %398 = vmatprep.subr.bf16.mxu0 0
    %399 = vmatpush1.bf16.msra.mxu0 0
    %400 = vmatprep.subr.bf16.mxu0 0
    %401 = vmatpush1.bf16.msra.mxu0 0
    %402 = vmatprep.subr.bf16.mxu0 0
    %403 = vmatpush1.bf16.msra.mxu0 0
    %404 = vmatprep.subr.bf16.mxu0 0
    %405 = vmatpush1.bf16.msra.mxu0 0
    %406 = vmatprep.subr.bf16.mxu0 0
    %407 = vmatpush1.bf16.msra.mxu0 0
    %408 = vmatprep.mubr.bf16.mxu0 0
    %409 = vmatmul.mubr.bf16.gmra.mrb[0].mxu0 %v371
    %v410 = vpop.f32.mrb[0].mxu0
    %v411 = vadd.f32 %v364, %v410
    %v412 = vpop.f32.mrb[0].mxu0
    %v413 = vpop.f32.mrb[0].mxu0
    %v414 = vpop.f32.mrb[0].mxu0
    %415 = vdwg.mxu0
    %v416 = vld [vmem:[%s12] sm:$0x1]
    %v418 = vlaneseq
    %v419 = vshrl.u32 %v418, 7
    %v420 = vsub.s32 0, %v419
    %v421 = vrot.slane %v416, %v420
    %v423 = vadd.f32 %v411, %v421
    %v424 = vmax.f32 %v423, 0.0
    %v425 = vpack.c.bf16 %v424, %v424
    %v426 = vld [vmem:[%s13] sm:$0xf]
    %v427 = vld [vmem:[%s13 + $0x4] sm:$0xf]
    %v428 = vld [vmem:[%s13 + $0x8] sm:$0xf]
    %v429 = vld [vmem:[%s14] sm:$0x1]
    %v431 = vlaneseq
    %v432 = vshrl.u32 %v431, 7
    %v433 = vsub.s32 0, %v432
    %v434 = vrot.slane %v429, %v433
    %v439 = vunpack.c.l.b16 %v426
    %v440 = vunpack.c.l.b16 %v427
    %v441 = vunpack.c.l.b16 %v428
    %v442 = vpack.c.b16 %v440, %v439
    %v443 = vpack.c.b16 %v441, %v441
    %v446 = vsel %vm262, %v425, 0
    %v449 = vsel %vm266, %v443, 0
    %451 = vmatprep.subr.bf16.mxu0 0
    %452 = vmatpush1.bf16.msra.mxu0 %v442
    %453 = vmatprep.subr.bf16.mxu0 0
    %454 = vmatpush1.bf16.msra.mxu0 %v449
    %455 = vmatprep.subr.bf16.mxu0 0
    %456 = vmatpush1.bf16.msra.mxu0 0
    %457 = vmatprep.subr.bf16.mxu0 0
    %458 = vmatpush1.bf16.msra.mxu0 0
    %459 = vmatprep.subr.bf16.mxu0 0
    %460 = vmatpush1.bf16.msra.mxu0 0
    %461 = vmatprep.subr.bf16.mxu0 0
    %462 = vmatpush1.bf16.msra.mxu0 0
    %463 = vmatprep.subr.bf16.mxu0 0
    %464 = vmatpush1.bf16.msra.mxu0 0
    %465 = vmatprep.subr.bf16.mxu0 0
    %466 = vmatpush1.bf16.msra.mxu0 0
    %467 = vmatprep.subr.bf16.mxu0 0
    %468 = vmatpush1.bf16.msra.mxu0 0
    %469 = vmatprep.subr.bf16.mxu0 0
    %470 = vmatpush1.bf16.msra.mxu0 0
    %471 = vmatprep.subr.bf16.mxu0 0
    %472 = vmatpush1.bf16.msra.mxu0 0
    %473 = vmatprep.subr.bf16.mxu0 0
    %474 = vmatpush1.bf16.msra.mxu0 0
    %475 = vmatprep.subr.bf16.mxu0 0
    %476 = vmatpush1.bf16.msra.mxu0 0
    %477 = vmatprep.subr.bf16.mxu0 0
    %478 = vmatpush1.bf16.msra.mxu0 0
    %479 = vmatprep.subr.bf16.mxu0 0
    %480 = vmatpush1.bf16.msra.mxu0 0
    %481 = vmatprep.subr.bf16.mxu0 0
    %482 = vmatpush1.bf16.msra.mxu0 0
    %483 = vmatprep.mubr.bf16.mxu0 0
    %484 = vmatmul.mubr.bf16.gmra.mrb[0].mxu0 %v446
    %v485 = vpop.f32.mrb[0].mxu0
    %v486 = vadd.f32 %v434, %v485
    %v487 = vpop.f32.mrb[0].mxu0
    %v488 = vpop.f32.mrb[0].mxu0
    %v489 = vpop.f32.mrb[0].mxu0
    %490 = vdwg.mxu0
    %v491 = vmax.f32 %v486, 0.0
    %v492 = vpack.c.bf16 %v491, %v491
    %v493 = vld [vmem:[%s15] sm:$0xf]
    %v494 = vld [vmem:[%s15 + $0x4] sm:$0xf]
    %v495 = vld [vmem:[%s15 + $0x8] sm:$0xf]
    %v496 = vld [vmem:[%s15 + $0xc] sm:$0xf]
    %v497 = vld [vmem:[%s16] sm:$0x1]
    %v499 = vlaneseq
    %v500 = vshrl.u32 %v499, 7
    %v501 = vsub.s32 0, %v500
    %v502 = vrot.slane %v497, %v501
    %v508 = vunpack.c.l.b16 %v493
    %v509 = vunpack.c.l.b16 %v494
    %v510 = vunpack.c.l.b16 %v495
    %v511 = vunpack.c.l.b16 %v496
    %v512 = vpack.c.b16 %v509, %v508
    %v513 = vpack.c.b16 %v511, %v510
    %v517 = vsel %vm197, %v492, 0
    %519 = vmatprep.subr.bf16.mxu0 0
    %520 = vmatpush1.bf16.msra.mxu0 %v512
    %521 = vmatprep.subr.bf16.mxu0 0
    %522 = vmatpush1.bf16.msra.mxu0 %v513
    %523 = vmatprep.subr.bf16.mxu0 0
    %524 = vmatpush1.bf16.msra.mxu0 0
    %525 = vmatprep.subr.bf16.mxu0 0
    %526 = vmatpush1.bf16.msra.mxu0 0
    %527 = vmatprep.subr.bf16.mxu0 0
    %528 = vmatpush1.bf16.msra.mxu0 0
    %529 = vmatprep.subr.bf16.mxu0 0
    %530 = vmatpush1.bf16.msra.mxu0 0
    %531 = vmatprep.subr.bf16.mxu0 0
    %532 = vmatpush1.bf16.msra.mxu0 0
    %533 = vmatprep.subr.bf16.mxu0 0
    %534 = vmatpush1.bf16.msra.mxu0 0
    %535 = vmatprep.subr.bf16.mxu0 0
    %536 = vmatpush1.bf16.msra.mxu0 0
    %537 = vmatprep.subr.bf16.mxu0 0
    %538 = vmatpush1.bf16.msra.mxu0 0
    %539 = vmatprep.subr.bf16.mxu0 0
    %540 = vmatpush1.bf16.msra.mxu0 0
    %541 = vmatprep.subr.bf16.mxu0 0
    %542 = vmatpush1.bf16.msra.mxu0 0
    %543 = vmatprep.subr.bf16.mxu0 0
    %544 = vmatpush1.bf16.msra.mxu0 0
    %545 = vmatprep.subr.bf16.mxu0 0
    %546 = vmatpush1.bf16.msra.mxu0 0
    %547 = vmatprep.subr.bf16.mxu0 0
    %548 = vmatpush1.bf16.msra.mxu0 0
    %549 = vmatprep.subr.bf16.mxu0 0
    %550 = vmatpush1.bf16.msra.mxu0 0
    %551 = vmatprep.mubr.bf16.mxu0 0
    %552 = vmatmul.mubr.bf16.gmra.mrb[0].mxu0 %v517
    %v553 = vpop.f32.mrb[0].mxu0
    %v554 = vadd.f32 %v502, %v553
    %v555 = vpop.f32.mrb[0].mxu0
    %v556 = vpop.f32.mrb[0].mxu0
    %v557 = vpop.f32.mrb[0].mxu0
    %558 = vdwg.mxu0
    %559 = vst.msk [vmem:[#allocation2] sm:$0xff] %vm120, %v554
    %561 = vrot.lane.b32.xlu0 %v305, 16
    %v562 = vpop.permute.xlu0 %561
    %vm564 = vcmask 261248
    %565 = vst.msk [vmem:[#allocation2] sm:$0xff] %vm564, %v562
    // Predicated region
    $region70: #{tpu_custom_call.1} parent=1 // pred_check
      _
    $region71: #{tpu_custom_call.1} parent=1 // pred_check_branch
      %567 = sbr.rel (0) target = $region73
    $region72: #{tpu_custom_call.1} parent=1 // pred_region
      %s569 = ssub.s32 128, 128
      %570 = vsyncadd [#allocation3], %s569
      %s572 = sshll.u32 [#allocation2], 4
      %s573 = int_to_ptr.vmem [resolvable:$true] %s572
      %575 = dma.vmem_to_hbm [thread:$0]  %s573, 128, %s17, [#allocation3]
    $region73: #{tpu_custom_call.1} parent=1 // pred_fallthru
      _
    // Predicated region
    $region74: #{tpu_custom_call.1} parent=1 // pred_check
      _
    $region75: #{tpu_custom_call.1} parent=1 // pred_check_branch
      %577 = sbr.rel (0) target = $region77
    $region76: #{tpu_custom_call.1} parent=1 // pred_region
      %578 = dma.done [#allocation3], 128
    $region77: #{tpu_custom_call.1} parent=1 // pred_fallthru
      _
    %579 = vsyncpa [#allocation3], 1

// kernel: tpu_custom_call.1
$region0: #{tpu_custom_call.1}
  #allocation0 [shape = 'u32[]', space=smem, size = 0x4, offset = 0x4, fixed_abs, tag = 'smem constant byte address 0x4 - core index']
  #allocation1 [shape = 'u32[144,128]{1,0:T(1,128)}', space=vmem, size = 0x12000, scoped, tag = 'internal scratch']
  %s0 = inlined_call_operand.vmem [shape: f32[8,16], index: 0, kind: input, shape index: {}]
  %s1 = inlined_call_operand.vmem [shape: f32[8,4], index: 1, kind: input, shape index: {}]
  %s2 = inlined_call_operand.vmem [shape: f32[8,8], index: 2, kind: input, shape index: {}]
  %s3 = inlined_call_operand.vmem [shape: bf16[16,32], index: 3, kind: input, shape index: {}]
  %s4 = inlined_call_operand.vmem [shape: bf16[4,32], index: 4, kind: input, shape index: {}]
  %s5 = inlined_call_operand.vmem [shape: f32[1,32], index: 5, kind: input, shape index: {}]
  %s6 = inlined_call_operand.vmem [shape: bf16[32,24], index: 6, kind: input, shape index: {}]
  %s7 = inlined_call_operand.vmem [shape: f32[1,24], index: 7, kind: input, shape index: {}]
  %s8 = inlined_call_operand.vmem [shape: bf16[24,16], index: 8, kind: input, shape index: {}]
  %s9 = inlined_call_operand.vmem [shape: f32[1,16], index: 9, kind: input, shape index: {}]
  %s10 = inlined_call_operand.vmem [shape: bf16[8,24], index: 10, kind: input, shape index: {}]
  %s11 = inlined_call_operand.vmem [shape: bf16[4,24], index: 11, kind: input, shape index: {}]
  %s12 = inlined_call_operand.vmem [shape: f32[1,24], index: 12, kind: input, shape index: {}]
  %s13 = inlined_call_operand.vmem [shape: bf16[24,32], index: 13, kind: input, shape index: {}]
  %s14 = inlined_call_operand.vmem [shape: f32[1,32], index: 14, kind: input, shape index: {}]
  %s15 = inlined_call_operand.vmem [shape: bf16[32,16], index: 15, kind: input, shape index: {}]
  %s16 = inlined_call_operand.vmem [shape: f32[1,16], index: 16, kind: input, shape index: {}]
  %s17 = inlined_call_operand.hbm [shape: f32[8,32], index: 17, kind: output, shape index: {}]
  %s18 = sld [smem:[#allocation0]]
  $region78: #{tpu_custom_call.1} parent=0
    _
  %s20 = ssub.s32 1, %s18
  %s21 = scalar_select 0, %s20, %s18
  $region1: #{tpu_custom_call.1} parent=0
    #allocation2 [shape = 'u8[4096]{0}', space=vmem, size = 0x1000, scoped, tag = 'output window, operand 0, single buffered']
    #allocation3 [shape = 's32[1]{0}', space=sflag, size = 0x4, scoped, tag = 'scoped memory for tpu_custom_call.1']
    %22 = vsyncpa [#allocation3], 0
    // Predicated region
    $region2: #{tpu_custom_call.1} parent=1 // pred_check
      _
    $region3: #{tpu_custom_call.1} parent=1 // pred_check_branch
      %24 = sbr.rel (0) target = $region5
    $region4: #{tpu_custom_call.1} parent=1 // pred_region
      _
    $region5: #{tpu_custom_call.1} parent=1 // pred_fallthru
      _
    // Predicated region
    $region6: #{tpu_custom_call.1} parent=1 // pred_check
      _
    $region7: #{tpu_custom_call.1} parent=1 // pred_check_branch
      %26 = sbr.rel (0) target = $region9
    $region8: #{tpu_custom_call.1} parent=1 // pred_region
      _
    $region9: #{tpu_custom_call.1} parent=1 // pred_fallthru
      _
    // Predicated region
    $region10: #{tpu_custom_call.1} parent=1 // pred_check
      _
    $region11: #{tpu_custom_call.1} parent=1 // pred_check_branch
      %28 = sbr.rel (0) target = $region13
    $region12: #{tpu_custom_call.1} parent=1 // pred_region
      _
    $region13: #{tpu_custom_call.1} parent=1 // pred_fallthru
      _
    // Predicated region
    $region14: #{tpu_custom_call.1} parent=1 // pred_check
      _
    $region15: #{tpu_custom_call.1} parent=1 // pred_check_branch
      %30 = sbr.rel (0) target = $region17
    $region16: #{tpu_custom_call.1} parent=1 // pred_region
      _
    $region17: #{tpu_custom_call.1} parent=1 // pred_fallthru
      _
    // Predicated region
    $region18: #{tpu_custom_call.1} parent=1 // pred_check
      _
    $region19: #{tpu_custom_call.1} parent=1 // pred_check_branch
      %32 = sbr.rel (0) target = $region21
    $region20: #{tpu_custom_call.1} parent=1 // pred_region
      _
    $region21: #{tpu_custom_call.1} parent=1 // pred_fallthru
      _
    // Predicated region
    $region22: #{tpu_custom_call.1} parent=1 // pred_check
      _
    $region23: #{tpu_custom_call.1} parent=1 // pred_check_branch
      %34 = sbr.rel (0) target = $region25
    $region24: #{tpu_custom_call.1} parent=1 // pred_region
      _
    $region25: #{tpu_custom_call.1} parent=1 // pred_fallthru
      _
    // Predicated region
    $region26: #{tpu_custom_call.1} parent=1 // pred_check
      _
    $region27: #{tpu_custom_call.1} parent=1 // pred_check_branch
      %36 = sbr.rel (0) target = $region29
    $region28: #{tpu_custom_call.1} parent=1 // pred_region
      _
    $region29: #{tpu_custom_call.1} parent=1 // pred_fallthru
      _
    // Predicated region
    $region30: #{tpu_custom_call.1} parent=1 // pred_check
      _
    $region31: #{tpu_custom_call.1} parent=1 // pred_check_branch
      %38 = sbr.rel (0) target = $region33
    $region32: #{tpu_custom_call.1} parent=1 // pred_region
      _
    $region33: #{tpu_custom_call.1} parent=1 // pred_fallthru
      _
    // Predicated region
    $region34: #{tpu_custom_call.1} parent=1 // pred_check
      _
    $region35: #{tpu_custom_call.1} parent=1 // pred_check_branch
      %40 = sbr.rel (0) target = $region37
    $region36: #{tpu_custom_call.1} parent=1 // pred_region
      _
    $region37: #{tpu_custom_call.1} parent=1 // pred_fallthru
      _
    // Predicated region
    $region38: #{tpu_custom_call.1} parent=1 // pred_check
      _
    $region39: #{tpu_custom_call.1} parent=1 // pred_check_branch
      %42 = sbr.rel (0) target = $region41
    $region40: #{tpu_custom_call.1} parent=1 // pred_region
      _
    $region41: #{tpu_custom_call.1} parent=1 // pred_fallthru
      _
    // Predicated region
    $region42: #{tpu_custom_call.1} parent=1 // pred_check
      _
    $region43: #{tpu_custom_call.1} parent=1 // pred_check_branch
      %44 = sbr.rel (0) target = $region45
    $region44: #{tpu_custom_call.1} parent=1 // pred_region
      _
    $region45: #{tpu_custom_call.1} parent=1 // pred_fallthru
      _
    // Predicated region
    $region46: #{tpu_custom_call.1} parent=1 // pred_check
      _
    $region47: #{tpu_custom_call.1} parent=1 // pred_check_branch
      %46 = sbr.rel (0) target = $region49
    $region48: #{tpu_custom_call.1} parent=1 // pred_region
      _
    $region49: #{tpu_custom_call.1} parent=1 // pred_fallthru
      _
    // Predicated region
    $region50: #{tpu_custom_call.1} parent=1 // pred_check
      _
    $region51: #{tpu_custom_call.1} parent=1 // pred_check_branch
      %48 = sbr.rel (0) target = $region53
    $region52: #{tpu_custom_call.1} parent=1 // pred_region
      _
    $region53: #{tpu_custom_call.1} parent=1 // pred_fallthru
      _
    // Predicated region
    $region54: #{tpu_custom_call.1} parent=1 // pred_check
      _
    $region55: #{tpu_custom_call.1} parent=1 // pred_check_branch
      %50 = sbr.rel (0) target = $region57
    $region56: #{tpu_custom_call.1} parent=1 // pred_region
      _
    $region57: #{tpu_custom_call.1} parent=1 // pred_fallthru
      _
    // Predicated region
    $region58: #{tpu_custom_call.1} parent=1 // pred_check
      _
    $region59: #{tpu_custom_call.1} parent=1 // pred_check_branch
      %52 = sbr.rel (0) target = $region61
    $region60: #{tpu_custom_call.1} parent=1 // pred_region
      _
    $region61: #{tpu_custom_call.1} parent=1 // pred_fallthru
      _
    // Predicated region
    $region62: #{tpu_custom_call.1} parent=1 // pred_check
      _
    $region63: #{tpu_custom_call.1} parent=1 // pred_check_branch
      %54 = sbr.rel (0) target = $region65
    $region64: #{tpu_custom_call.1} parent=1 // pred_region
      _
    $region65: #{tpu_custom_call.1} parent=1 // pred_fallthru
      _
    // Predicated region
    $region66: #{tpu_custom_call.1} parent=1 // pred_check
      _
    $region67: #{tpu_custom_call.1} parent=1 // pred_check_branch
      %56 = sbr.rel (0) target = $region69
    $region68: #{tpu_custom_call.1} parent=1 // pred_region
      _
    $region69: #{tpu_custom_call.1} parent=1 // pred_fallthru
      _
    %v58 = vld [vmem:[%s0] sm:$0xff]
    %v59 = vpack.c.bf16 %v58, %v58
    %v60 = vld [vmem:[%s1] sm:$0xff]
    %v61 = vpack.c.bf16 %v60, %v60
    %v62 = vld [vmem:[%s2] sm:$0xff]
    %v63 = vld [vmem:[%s3] sm:$0xf]
    %v64 = vld [vmem:[%s3 + $0x4] sm:$0xf]
    %v65 = vld [vmem:[%s4] sm:$0x3]
    %vm66 = vcmask 31744
    %v68 = vsel %vm66, %v61, 0
    %vm70 = vcmask 1041408
    %v72 = vsel %vm70, %v65, 0
    %74 = vmatprep.subr.bf16.mxu0 0
    %75 = vmatpush1.bf16.msra.mxu0 %v72
    %76 = vmatprep.subr.bf16.mxu0 0
    %77 = vmatpush1.bf16.msra.mxu0 0
    %78 = vmatprep.subr.bf16.mxu0 0
    %79 = vmatpush1.bf16.msra.mxu0 0
    %80 = vmatprep.subr.bf16.mxu0 0
    %81 = vmatpush1.bf16.msra.mxu0 0
    %82 = vmatprep.subr.bf16.mxu0 0
    %83 = vmatpush1.bf16.msra.mxu0 0
    %84 = vmatprep.subr.bf16.mxu0 0
    %85 = vmatpush1.bf16.msra.mxu0 0
    %86 = vmatprep.subr.bf16.mxu0 0
    %87 = vmatpush1.bf16.msra.mxu0 0
    %88 = vmatprep.subr.bf16.mxu0 0
    %89 = vmatpush1.bf16.msra.mxu0 0
    %90 = vmatprep.subr.bf16.mxu0 0
    %91 = vmatpush1.bf16.msra.mxu0 0
    %92 = vmatprep.subr.bf16.mxu0 0
    %93 = vmatpush1.bf16.msra.mxu0 0
    %94 = vmatprep.subr.bf16.mxu0 0
    %95 = vmatpush1.bf16.msra.mxu0 0
    %96 = vmatprep.subr.bf16.mxu0 0
    %97 = vmatpush1.bf16.msra.mxu0 0
    %98 = vmatprep.subr.bf16.mxu0 0
    %99 = vmatpush1.bf16.msra.mxu0 0
    %100 = vmatprep.subr.bf16.mxu0 0
    %101 = vmatpush1.bf16.msra.mxu0 0
    %102 = vmatprep.subr.bf16.mxu0 0
    %103 = vmatpush1.bf16.msra.mxu0 0
    %104 = vmatprep.subr.bf16.mxu0 0
    %105 = vmatpush1.bf16.msra.mxu0 0
    %106 = vmatprep.mubr.bf16.mxu0 0
    %107 = vmatmul.mubr.bf16.gmra.mrb[0].mxu0 %v68
    %v108 = vpop.f32.mrb[0].mxu0
    %v109 = vadd.f32 0.0, %v108
    %v110 = vpop.f32.mrb[0].mxu0
    %v111 = vpop.f32.mrb[0].mxu0
    %v112 = vpop.f32.mrb[0].mxu0
    %113 = vdwg.mxu0
    %v116 = vunpack.c.l.b16 %v63
    %v117 = vunpack.c.l.b16 %v64
    %v118 = vpack.c.b16 %v117, %v116
    %vm120 = vcmask 130048
    %v122 = vsel %vm120, %v59, 0
    %124 = vmatprep.subr.bf16.mxu0 0
    %125 = vmatpush1.bf16.msra.mxu0 %v118
    %126 = vmatprep.subr.bf16.mxu0 0
    %127 = vmatpush1.bf16.msra.mxu0 0
    %128 = vmatprep.subr.bf16.mxu0 0
    %129 = vmatpush1.bf16.msra.mxu0 0
    %130 = vmatprep.subr.bf16.mxu0 0
    %131 = vmatpush1.bf16.msra.mxu0 0
    %132 = vmatprep.subr.bf16.mxu0 0
    %133 = vmatpush1.bf16.msra.mxu0 0
    %134 = vmatprep.subr.bf16.mxu0 0
    %135 = vmatpush1.bf16.msra.mxu0 0
    %136 = vmatprep.subr.bf16.mxu0 0
    %137 = vmatpush1.bf16.msra.mxu0 0
    %138 = vmatprep.subr.bf16.mxu0 0
    %139 = vmatpush1.bf16.msra.mxu0 0
    %140 = vmatprep.subr.bf16.mxu0 0
    %141 = vmatpush1.bf16.msra.mxu0 0
    %142 = vmatprep.subr.bf16.mxu0 0
    %143 = vmatpush1.bf16.msra.mxu0 0
    %144 = vmatprep.subr.bf16.mxu0 0
    %145 = vmatpush1.bf16.msra.mxu0 0
    %146 = vmatprep.subr.bf16.mxu0 0
    %147 = vmatpush1.bf16.msra.mxu0 0
    %148 = vmatprep.subr.bf16.mxu0 0
    %149 = vmatpush1.bf16.msra.mxu0 0
    %150 = vmatprep.subr.bf16.mxu0 0
    %151 = vmatpush1.bf16.msra.mxu0 0
    %152 = vmatprep.subr.bf16.mxu0 0
    %153 = vmatpush1.bf16.msra.mxu0 0
    %154 = vmatprep.subr.bf16.mxu0 0
    %155 = vmatpush1.bf16.msra.mxu0 0
    %156 = vmatprep.mubr.bf16.mxu0 0
    %157 = vmatmul.mubr.bf16.gmra.mrb[0].mxu0 %v122
    %v158 = vpop.f32.mrb[0].mxu0
    %v159 = vadd.f32 %v109, %v158
    %v160 = vpop.f32.mrb[0].mxu0
    %v161 = vpop.f32.mrb[0].mxu0
    %v162 = vpop.f32.mrb[0].mxu0
    %163 = vdwg.mxu0
    %v164 = vld [vmem:[%s5] sm:$0x1]
    %v166 = vlaneseq
    %v167 = vshrl.u32 %v166, 7
    %v168 = vsub.s32 0, %v167
    %v169 = vrot.slane %v164, %v168
    %v171 = vadd.f32 %v159, %v169
    %v172 = vmax.f32 %v171, 0.0
    %v173 = vpack.c.bf16 %v172, %v172
    %v174 = vld [vmem:[%s6] sm:$0xf]
    %v175 = vld [vmem:[%s6 + $0x4] sm:$0xf]
    %v176 = vld [vmem:[%s6 + $0x8] sm:$0xf]
    %v177 = vld [vmem:[%s6 + $0xc] sm:$0xf]
    %v178 = vld [vmem:[%s7] sm:$0x1]
    %v180 = vlaneseq
    %v181 = vshrl.u32 %v180, 7
    %v182 = vsub.s32 0, %v181
    %v183 = vrot.slane %v178, %v182
    %v189 = vunpack.c.l.b16 %v174
    %v190 = vunpack.c.l.b16 %v175
    %v191 = vunpack.c.l.b16 %v176
    %v192 = vunpack.c.l.b16 %v177
    %v193 = vpack.c.b16 %v190, %v189
    %v194 = vpack.c.b16 %v192, %v191
    %vm197 = vcmask 261120
    %v199 = vsel %vm197, %v173, 0
    %201 = vmatprep.subr.bf16.mxu0 0
    %202 = vmatpush1.bf16.msra.mxu0 %v193
    %203 = vmatprep.subr.bf16.mxu0 0
    %204 = vmatpush1.bf16.msra.mxu0 %v194
    %205 = vmatprep.subr.bf16.mxu0 0
    %206 = vmatpush1.bf16.msra.mxu0 0
    %207 = vmatprep.subr.bf16.mxu0 0
    %208 = vmatpush1.bf16.msra.mxu0 0
    %209 = vmatprep.subr.bf16.mxu0 0
    %210 = vmatpush1.bf16.msra.mxu0 0
    %211 = vmatprep.subr.bf16.mxu0 0
    %212 = vmatpush1.bf16.msra.mxu0 0
    %213 = vmatprep.subr.bf16.mxu0 0
    %214 = vmatpush1.bf16.msra.mxu0 0
    %215 = vmatprep.subr.bf16.mxu0 0
    %216 = vmatpush1.bf16.msra.mxu0 0
    %217 = vmatprep.subr.bf16.mxu0 0
    %218 = vmatpush1.bf16.msra.mxu0 0
    %219 = vmatprep.subr.bf16.mxu0 0
    %220 = vmatpush1.bf16.msra.mxu0 0
    %221 = vmatprep.subr.bf16.mxu0 0
    %222 = vmatpush1.bf16.msra.mxu0 0
    %223 = vmatprep.subr.bf16.mxu0 0
    %224 = vmatpush1.bf16.msra.mxu0 0
    %225 = vmatprep.subr.bf16.mxu0 0
    %226 = vmatpush1.bf16.msra.mxu0 0
    %227 = vmatprep.subr.bf16.mxu0 0
    %228 = vmatpush1.bf16.msra.mxu0 0
    %229 = vmatprep.subr.bf16.mxu0 0
    %230 = vmatpush1.bf16.msra.mxu0 0
    %231 = vmatprep.subr.bf16.mxu0 0
    %232 = vmatpush1.bf16.msra.mxu0 0
    %233 = vmatprep.mubr.bf16.mxu0 0
    %234 = vmatmul.mubr.bf16.gmra.mrb[0].mxu0 %v199
    %v235 = vpop.f32.mrb[0].mxu0
    %v236 = vadd.f32 %v183, %v235
    %v237 = vpop.f32.mrb[0].mxu0
    %v238 = vpop.f32.mrb[0].mxu0
    %v239 = vpop.f32.mrb[0].mxu0
    %240 = vdwg.mxu0
    %v241 = vmax.f32 %v236, 0.0
    %v242 = vpack.c.bf16 %v241, %v241
    %v243 = vld [vmem:[%s8] sm:$0xf]
    %v244 = vld [vmem:[%s8 + $0x4] sm:$0xf]
    %v245 = vld [vmem:[%s8 + $0x8] sm:$0xf]
    %v246 = vld [vmem:[%s9] sm:$0x1]
    %v248 = vlaneseq
    %v249 = vshrl.u32 %v248, 7
    %v250 = vsub.s32 0, %v249
    %v251 = vrot.slane %v246, %v250
    %v256 = vunpack.c.l.b16 %v243
    %v257 = vunpack.c.l.b16 %v244
    %v258 = vunpack.c.l.b16 %v245
    %v259 = vpack.c.b16 %v257, %v256
    %v260 = vpack.c.b16 %v258, %v258
    %vm262 = vcmask 195584
    %v264 = vsel %vm262, %v242, 0
    %vm266 = vcmask 1043456
    %v268 = vsel %vm266, %v260, 0
    %270 = vmatprep.subr.bf16.mxu0 0
    %271 = vmatpush1.bf16.msra.mxu0 %v259
    %272 = vmatprep.subr.bf16.mxu0 0
    %273 = vmatpush1.bf16.msra.mxu0 %v268
    %274 = vmatprep.subr.bf16.mxu0 0
    %275 = vmatpush1.bf16.msra.mxu0 0
    %276 = vmatprep.subr.bf16.mxu0 0
    %277 = vmatpush1.bf16.msra.mxu0 0
    %278 = vmatprep.subr.bf16.mxu0 0
    %279 = vmatpush1.bf16.msra.mxu0 0
    %280 = vmatprep.subr.bf16.mxu0 0
    %281 = vmatpush1.bf16.msra.mxu0 0
    %282 = vmatprep.subr.bf16.mxu0 0
    %283 = vmatpush1.bf16.msra.mxu0 0
    %284 = vmatprep.subr.bf16.mxu0 0
    %285 = vmatpush1.bf16.msra.mxu0 0
    %286 = vmatprep.subr.bf16.mxu0 0
    %287 = vmatpush1.bf16.msra.mxu0 0
    %288 = vmatprep.subr.bf16.mxu0 0
    %289 = vmatpush1.bf16.msra.mxu0 0
    %290 = vmatprep.subr.bf16.mxu0 0
    %291 = vmatpush1.bf16.msra.mxu0 0
    %292 = vmatprep.subr.bf16.mxu0 0
    %293 = vmatpush1.bf16.msra.mxu0 0
    %294 = vmatprep.subr.bf16.mxu0 0
    %295 = vmatpush1.bf16.msra.mxu0 0
    %296 = vmatprep.subr.bf16.mxu0 0
    %297 = vmatpush1.bf16.msra.mxu0 0
    %298 = vmatprep.subr.bf16.mxu0 0
    %299 = vmatpush1.bf16.msra.mxu0 0
    %300 = vmatprep.subr.bf16.mxu0 0
    %301 = vmatpush1.bf16.msra.mxu0 0
    %302 = vmatprep.mubr.bf16.mxu0 0
    %303 = vmatmul.mubr.bf16.gmra.mrb[0].mxu0 %v264
    %v304 = vpop.f32.mrb[0].mxu0
    %v305 = vadd.f32 %v251, %v304
    %v306 = vpop.f32.mrb[0].mxu0
    %v307 = vpop.f32.mrb[0].mxu0
    %v308 = vpop.f32.mrb[0].mxu0
    %309 = vdwg.mxu0
    %v310 = vmul.f32 %v305, 0.5
    %v311 = vmul.f32 %v310, 1.442695
    %v312 = vpow.pop %v311
    %314 = vrot.lane.b32.xlu0 %v62, 8
    %v315 = vpop.permute.xlu0 %314
    %v317 = vmul.f32 %v312, %v315
    %319 = vrot.lane.b32.xlu0 %v317, 120
    %v320 = vpop.permute.xlu0 %319
    %v322 = vadd.f32 %v305, %v320
    %v323 = vpack.c.bf16 %v322, %v322
    %v324 = vld [vmem:[%s10] sm:$0xf]
    %v325 = vld [vmem:[%s11] sm:$0x3]
    %v327 = vsel %vm70, %v325, 0
    %329 = vmatprep.subr.bf16.mxu0 0
    %330 = vmatpush1.bf16.msra.mxu0 %v327
    %331 = vmatprep.subr.bf16.mxu0 0
    %332 = vmatpush1.bf16.msra.mxu0 0
    %333 = vmatprep.subr.bf16.mxu0 0
    %334 = vmatpush1.bf16.msra.mxu0 0
    %335 = vmatprep.subr.bf16.mxu0 0
    %336 = vmatpush1.bf16.msra.mxu0 0
    %337 = vmatprep.subr.bf16.mxu0 0
    %338 = vmatpush1.bf16.msra.mxu0 0
    %339 = vmatprep.subr.bf16.mxu0 0
    %340 = vmatpush1.bf16.msra.mxu0 0
    %341 = vmatprep.subr.bf16.mxu0 0
    %342 = vmatpush1.bf16.msra.mxu0 0
    %343 = vmatprep.subr.bf16.mxu0 0
    %344 = vmatpush1.bf16.msra.mxu0 0
    %345 = vmatprep.subr.bf16.mxu0 0
    %346 = vmatpush1.bf16.msra.mxu0 0
    %347 = vmatprep.subr.bf16.mxu0 0
    %348 = vmatpush1.bf16.msra.mxu0 0
    %349 = vmatprep.subr.bf16.mxu0 0
    %350 = vmatpush1.bf16.msra.mxu0 0
    %351 = vmatprep.subr.bf16.mxu0 0
    %352 = vmatpush1.bf16.msra.mxu0 0
    %353 = vmatprep.subr.bf16.mxu0 0
    %354 = vmatpush1.bf16.msra.mxu0 0
    %355 = vmatprep.subr.bf16.mxu0 0
    %356 = vmatpush1.bf16.msra.mxu0 0
    %357 = vmatprep.subr.bf16.mxu0 0
    %358 = vmatpush1.bf16.msra.mxu0 0
    %359 = vmatprep.subr.bf16.mxu0 0
    %360 = vmatpush1.bf16.msra.mxu0 0
    %361 = vmatprep.mubr.bf16.mxu0 0
    %362 = vmatmul.mubr.bf16.gmra.mrb[0].mxu0 %v68
    %v363 = vpop.f32.mrb[0].mxu0
    %v364 = vadd.f32 0.0, %v363
    %v365 = vpop.f32.mrb[0].mxu0
    %v366 = vpop.f32.mrb[0].mxu0
    %v367 = vpop.f32.mrb[0].mxu0
    %368 = vdwg.mxu0
    %vm369 = vcmask 64512
    %v371 = vsel %vm369, %v323, 0
    %v374 = vsel %vm266, %v324, 0
    %376 = vmatprep.subr.bf16.mxu0 0
    %377 = vmatpush1.bf16.msra.mxu0 %v374
    %378 = vmatprep.subr.bf16.mxu0 0
    %379 = vmatpush1.bf16.msra.mxu0 0
    %380 = vmatprep.subr.bf16.mxu0 0
    %381 = vmatpush1.bf16.msra.mxu0 0
    %382 = vmatprep.subr.bf16.mxu0 0
    %383 = vmatpush1.bf16.msra.mxu0 0
    %384 = vmatprep.subr.bf16.mxu0 0
    %385 = vmatpush1.bf16.msra.mxu0 0
    %386 = vmatprep.subr.bf16.mxu0 0
    %387 = vmatpush1.bf16.msra.mxu0 0
    %388 = vmatprep.subr.bf16.mxu0 0
    %389 = vmatpush1.bf16.msra.mxu0 0
    %390 = vmatprep.subr.bf16.mxu0 0
    %391 = vmatpush1.bf16.msra.mxu0 0
    %392 = vmatprep.subr.bf16.mxu0 0
    %393 = vmatpush1.bf16.msra.mxu0 0
    %394 = vmatprep.subr.bf16.mxu0 0
    %395 = vmatpush1.bf16.msra.mxu0 0
    %396 = vmatprep.subr.bf16.mxu0 0
    %397 = vmatpush1.bf16.msra.mxu0 0
    %398 = vmatprep.subr.bf16.mxu0 0
    %399 = vmatpush1.bf16.msra.mxu0 0
    %400 = vmatprep.subr.bf16.mxu0 0
    %401 = vmatpush1.bf16.msra.mxu0 0
    %402 = vmatprep.subr.bf16.mxu0 0
    %403 = vmatpush1.bf16.msra.mxu0 0
    %404 = vmatprep.subr.bf16.mxu0 0
    %405 = vmatpush1.bf16.msra.mxu0 0
    %406 = vmatprep.subr.bf16.mxu0 0
    %407 = vmatpush1.bf16.msra.mxu0 0
    %408 = vmatprep.mubr.bf16.mxu0 0
    %409 = vmatmul.mubr.bf16.gmra.mrb[0].mxu0 %v371
    %v410 = vpop.f32.mrb[0].mxu0
    %v411 = vadd.f32 %v364, %v410
    %v412 = vpop.f32.mrb[0].mxu0
    %v413 = vpop.f32.mrb[0].mxu0
    %v414 = vpop.f32.mrb[0].mxu0
    %415 = vdwg.mxu0
    %v416 = vld [vmem:[%s12] sm:$0x1]
    %v418 = vlaneseq
    %v419 = vshrl.u32 %v418, 7
    %v420 = vsub.s32 0, %v419
    %v421 = vrot.slane %v416, %v420
    %v423 = vadd.f32 %v411, %v421
    %v424 = vmax.f32 %v423, 0.0
    %v425 = vpack.c.bf16 %v424, %v424
    %v426 = vld [vmem:[%s13] sm:$0xf]
    %v427 = vld [vmem:[%s13 + $0x4] sm:$0xf]
    %v428 = vld [vmem:[%s13 + $0x8] sm:$0xf]
    %v429 = vld [vmem:[%s14] sm:$0x1]
    %v431 = vlaneseq
    %v432 = vshrl.u32 %v431, 7
    %v433 = vsub.s32 0, %v432
    %v434 = vrot.slane %v429, %v433
    %v439 = vunpack.c.l.b16 %v426
    %v440 = vunpack.c.l.b16 %v427
    %v441 = vunpack.c.l.b16 %v428
    %v442 = vpack.c.b16 %v440, %v439
    %v443 = vpack.c.b16 %v441, %v441
    %v446 = vsel %vm262, %v425, 0
    %v449 = vsel %vm266, %v443, 0
    %451 = vmatprep.subr.bf16.mxu0 0
    %452 = vmatpush1.bf16.msra.mxu0 %v442
    %453 = vmatprep.subr.bf16.mxu0 0
    %454 = vmatpush1.bf16.msra.mxu0 %v449
    %455 = vmatprep.subr.bf16.mxu0 0
    %456 = vmatpush1.bf16.msra.mxu0 0
    %457 = vmatprep.subr.bf16.mxu0 0
    %458 = vmatpush1.bf16.msra.mxu0 0
    %459 = vmatprep.subr.bf16.mxu0 0
    %460 = vmatpush1.bf16.msra.mxu0 0
    %461 = vmatprep.subr.bf16.mxu0 0
    %462 = vmatpush1.bf16.msra.mxu0 0
    %463 = vmatprep.subr.bf16.mxu0 0
    %464 = vmatpush1.bf16.msra.mxu0 0
    %465 = vmatprep.subr.bf16.mxu0 0
    %466 = vmatpush1.bf16.msra.mxu0 0
    %467 = vmatprep.subr.bf16.mxu0 0
    %468 = vmatpush1.bf16.msra.mxu0 0
    %469 = vmatprep.subr.bf16.mxu0 0
    %470 = vmatpush1.bf16.msra.mxu0 0
    %471 = vmatprep.subr.bf16.mxu0 0
    %472 = vmatpush1.bf16.msra.mxu0 0
    %473 = vmatprep.subr.bf16.mxu0 0
    %474 = vmatpush1.bf16.msra.mxu0 0
    %475 = vmatprep.subr.bf16.mxu0 0
    %476 = vmatpush1.bf16.msra.mxu0 0
    %477 = vmatprep.subr.bf16.mxu0 0
    %478 = vmatpush1.bf16.msra.mxu0 0
    %479 = vmatprep.subr.bf16.mxu0 0
    %480 = vmatpush1.bf16.msra.mxu0 0
    %481 = vmatprep.subr.bf16.mxu0 0
    %482 = vmatpush1.bf16.msra.mxu0 0
    %483 = vmatprep.mubr.bf16.mxu0 0
    %484 = vmatmul.mubr.bf16.gmra.mrb[0].mxu0 %v446
    %v485 = vpop.f32.mrb[0].mxu0
    %v486 = vadd.f32 %v434, %v485
    %v487 = vpop.f32.mrb[0].mxu0
    %v488 = vpop.f32.mrb[0].mxu0
    %v489 = vpop.f32.mrb[0].mxu0
    %490 = vdwg.mxu0
    %v491 = vmax.f32 %v486, 0.0
    %v492 = vpack.c.bf16 %v491, %v491
    %v493 = vld [vmem:[%s15] sm:$0xf]
    %v494 = vld [vmem:[%s15 + $0x4] sm:$0xf]
    %v495 = vld [vmem:[%s15 + $0x8] sm:$0xf]
    %v496 = vld [vmem:[%s15 + $0xc] sm:$0xf]
    %v497 = vld [vmem:[%s16] sm:$0x1]
    %v499 = vlaneseq
    %v500 = vshrl.u32 %v499, 7
    %v501 = vsub.s32 0, %v500
    %v502 = vrot.slane %v497, %v501
    %v508 = vunpack.c.l.b16 %v493
    %v509 = vunpack.c.l.b16 %v494
    %v510 = vunpack.c.l.b16 %v495
    %v511 = vunpack.c.l.b16 %v496
    %v512 = vpack.c.b16 %v509, %v508
    %v513 = vpack.c.b16 %v511, %v510
    %v517 = vsel %vm197, %v492, 0
    %519 = vmatprep.subr.bf16.mxu0 0
    %520 = vmatpush1.bf16.msra.mxu0 %v512
    %521 = vmatprep.subr.bf16.mxu0 0
    %522 = vmatpush1.bf16.msra.mxu0 %v513
    %523 = vmatprep.subr.bf16.mxu0 0
    %524 = vmatpush1.bf16.msra.mxu0 0
    %525 = vmatprep.subr.bf16.mxu0 0
    %526 = vmatpush1.bf16.msra.mxu0 0
    %527 = vmatprep.subr.bf16.mxu0 0
    %528 = vmatpush1.bf16.msra.mxu0 0
    %529 = vmatprep.subr.bf16.mxu0 0
    %530 = vmatpush1.bf16.msra.mxu0 0
    %531 = vmatprep.subr.bf16.mxu0 0
    %532 = vmatpush1.bf16.msra.mxu0 0
    %533 = vmatprep.subr.bf16.mxu0 0
    %534 = vmatpush1.bf16.msra.mxu0 0
    %535 = vmatprep.subr.bf16.mxu0 0
    %536 = vmatpush1.bf16.msra.mxu0 0
    %537 = vmatprep.subr.bf16.mxu0 0
    %538 = vmatpush1.bf16.msra.mxu0 0
    %539 = vmatprep.subr.bf16.mxu0 0
    %540 = vmatpush1.bf16.msra.mxu0 0
    %541 = vmatprep.subr.bf16.mxu0 0
    %542 = vmatpush1.bf16.msra.mxu0 0
    %543 = vmatprep.subr.bf16.mxu0 0
    %544 = vmatpush1.bf16.msra.mxu0 0
    %545 = vmatprep.subr.bf16.mxu0 0
    %546 = vmatpush1.bf16.msra.mxu0 0
    %547 = vmatprep.subr.bf16.mxu0 0
    %548 = vmatpush1.bf16.msra.mxu0 0
    %549 = vmatprep.subr.bf16.mxu0 0
    %550 = vmatpush1.bf16.msra.mxu0 0
    %551 = vmatprep.mubr.bf16.mxu0 0
    %552 = vmatmul.mubr.bf16.gmra.mrb[0].mxu0 %v517
    %v553 = vpop.f32.mrb[0].mxu0
    %v554 = vadd.f32 %v502, %v553
    %v555 = vpop.f32.mrb[0].mxu0
    %v556 = vpop.f32.mrb[0].mxu0
    %v557 = vpop.f32.mrb[0].mxu0
    %558 = vdwg.mxu0
    %559 = vst.msk [vmem:[#allocation2] sm:$0xff] %vm120, %v554
    %561 = vrot.lane.b32.xlu0 %v305, 16
    %v562 = vpop.permute.xlu0 %561
    %vm564 = vcmask 261248
    %565 = vst.msk [vmem:[#allocation2] sm:$0xff] %vm564, %v562
    // Predicated region
    $region70: #{tpu_custom_call.1} parent=1 // pred_check
      _
    $region71: #{tpu_custom_call.1} parent=1 // pred_check_branch
      %567 = sbr.rel (0) target = $region73
    $region72: #{tpu_custom_call.1} parent=1 // pred_region
      %s569 = ssub.s32 128, 128
      %570 = vsyncadd [#allocation3], %s569
      %s572 = sshll.u32 [#allocation2], 4
      %s573 = int_to_ptr.vmem [resolvable:$true] %s572
      %575 = dma.vmem_to_hbm [thread:$0]  %s573, 128, %s17, [#allocation3]
    $region73: #{tpu_custom_call.1} parent=1 // pred_fallthru
      _
    // Predicated region
    $region74: #{tpu_custom_call.1} parent=1 // pred_check
      _
    $region75: #{tpu_custom_call.1} parent=1 // pred_check_branch
      %577 = sbr.rel (0) target = $region77
    $region76: #{tpu_custom_call.1} parent=1 // pred_region
      %578 = dma.done [#allocation3], 128
    $region77: #{tpu_custom_call.1} parent=1 // pred_fallthru
      _
    %579 = vsyncpa [#allocation3], 1

</llo_original>
